<compile_context>
chip_gen: v5e
topology: v5e:2x2
jax: 0.10.0
libtpu: 0.0.40
codegen_flags: <defaults>
</compile_context>

<pallas_src>
import functools

import jax
import jax.numpy as jnp
from jax import lax
from jax.experimental import pallas as pl
from jax.experimental.pallas import tpu as pltpu

# ---- model hyper-parameters (small, consistent with the module's __init__) ----
VOCAB = 50           # vocab_size
EMBED = 16           # embedding_dim
HIDDEN = 32          # hidden_dim (BiLSTM output size)
HDIR = HIDDEN // 2   # per-direction LSTM hidden size
TAGS = 5             # len(tag2id)
BATCH = 2
SEQ = 8
# dropout = 0.5 in __init__; forward() runs in eval/inference -> identity.
# TODO(synk): training-mode dropout not implemented (no-op at inference).

BPAD = 8             # batch padded to fill the 8-sublane vreg dimension
GATE = 8 * HDIR      # 128 = stacked-direction gate width (one full lane width)
VPAD = 64            # vocab block rows padded to a bf16 sub-tile multiple
WMM_ROWS = 2 * VPAD + 4 * HDIR   # packed bf16 weight block rows (192)
TRANS_ROW = 8        # row offset of the transition matrix inside the const block
CONST_ROWS = 16      # packed f32 constant block rows


def _vmem_spec():
    return pl.BlockSpec(memory_space=pltpu.MemorySpace.VMEM)


# ----------------------- fully fused BiLSTM + CRF kernel -----------------------
def fused_bilstm_crf_kernel(sm_ref, wmm_ref, cst_ref, tag_ref, *, S, B, H, T, VP):
    # sm_ref:  (B, 2S) int32   cols [0,S) = token ids, cols [S,2S) = valid mask
    # wmm_ref: (192, 128) bf16 rows [0,VP)       = emb @ W_ih (forward, gate-interleaved)
    #                          rows [VP,2VP)     = emb @ W_ih (backward)
    #                          rows [2VP,2VP+2H) = stacked recurrent W_hh
    #                          rows [2VP+2H,...) = hidden2tag W (cols >= T zero)
    # cst_ref: (16, 128) f32   row 0 b_in, 1 b_tag, 2 start, 3 end, rows 8..8+T trans
    # tag_ref: (B, S) int32 output
    H2 = 2 * H
    G = 8 * H
    off_pb = VP
    off_whh = 2 * VP
    off_wtag = 2 * VP + H2

    sm = sm_ref[...]
    ids = sm[:, 0:S]                 # (B, S) token ids
    mcols = sm[:, S:2 * S]           # (B, S) valid-token mask

    cst = cst_ref[...]
    b_in = cst[0:1, :]               # (1, G)
    b_tag = cst[1:2, :]              # (1, G)
    start = cst[2:3, 0:T]            # (1, T)
    end = cst[3:4, 0:T]              # (1, T)
    trans = cst[TRANS_ROW:TRANS_ROW + T, 0:T]   # (T, T)

    # ---- embedding lookup (one-hot matmul against the folded emb@W_ih tables),
    #      hoisted out of the recurrence: 2 MXU pushes for the whole sequence ----
    iota_v = lax.broadcasted_iota(jnp.int32, (B, VP), 1)
    oh = [(ids[:, s:s + 1] == iota_v).astype(jnp.float32) for s in range(S)]
    oh_f = jnp.concatenate(oh, axis=0).astype(jnp.bfloat16)         # (S*B, VP)
    oh_b = jnp.concatenate(oh[::-1], axis=0).astype(jnp.bfloat16)   # time-reversed
    p_f = wmm_ref[0:VP, :]
    p_b = wmm_ref[off_pb:off_pb + VP, :]
    xp = (jnp.dot(oh_f, p_f, preferred_element_type=jnp.float32)
          + jnp.dot(oh_b, p_b, preferred_element_type=jnp.float32)
          + b_in)                                                   # (S*B, G) f32

    w_hh = wmm_ref[off_whh:off_whh + H2, :]                          # (2H, G) bf16
    w_tag = wmm_ref[off_wtag:off_wtag + H2, :]                       # (2H, G) bf16

    # static lane masks (hoisted out of the loop)
    lane_g = lax.broadcasted_iota(jnp.int32, (B, G), 1)
    tanh_lanes = (lane_g >= 2 * H2) & (lane_g < 3 * H2)              # g-gate lanes
    lane_h2 = lax.broadcasted_iota(jnp.int32, (B, H2), 1)
    fwd_lanes = lane_h2 < H                                          # forward half

    # ---- stacked bidirectional LSTM recurrence, fully unrolled over S ----
    # gate column layout: [i_f, i_b, f_f, f_b, g_f, g_b, o_f, o_b], each H wide
    h = jnp.zeros((B, H2), jnp.float32)
    c = jnp.zeros((B, H2), jnp.float32)
    hsteps = [None] * S
    for s in range(S):
        gates = xp[s * B:(s + 1) * B, :] + jnp.dot(
            h.astype(jnp.bfloat16), w_hh, preferred_element_type=jnp.float32)
        # two full-vreg activations + lane select instead of 4 sub-vreg passes
        act = jnp.where(tanh_lanes, jnp.tanh(gates), jax.nn.sigmoid(gates))
        gi = act[:, 0:H2]
        gf = act[:, H2:2 * H2]
        gg = act[:, 2 * H2:3 * H2]
        go = act[:, 3 * H2:4 * H2]
        r = S - 1 - s
        mrev = (mcols[:, r:r + 1] > 0).astype(jnp.float32)           # (B, 1)
        keep = jnp.where(fwd_lanes, 1.0, mrev)                       # reset bwd state
        c = keep * (gf * c + gi * gg)
        h = keep * (go * jnp.tanh(c))
        hsteps[s] = h          # fwd half belongs to time s, bwd half to time S-1-s

    # ---- hidden2tag projection on vreg-resident hidden states (one matmul) ----
    hidden_tm = jnp.concatenate(
        [jnp.where(fwd_lanes, hsteps[t], hsteps[S - 1 - t]) for t in range(S)],
        axis=0).astype(jnp.bfloat16)                                 # (S*B, 2H)
    feats = (jnp.dot(hidden_tm, w_tag, preferred_element_type=jnp.float32)
             + b_tag)                                                # (S*B, G)

    # ---- CRF viterbi forward (mask-aware), unrolled over S (and T_prev) ----
    score = start + feats[0:B, 0:T]                                  # (B, T)
    bps = []
    for t in range(1, S):
        best = score[:, 0:1] + trans[0:1, :]                         # prev tag 0
        bp = jnp.zeros((B, T), jnp.int32)
        for p in range(1, T):                                        # tiny unrolled loop
            cand = score[:, p:p + 1] + trans[p:p + 1, :]             # (B, T)
            take = cand > best                                       # min-index ties
            best = jnp.where(take, cand, best)
            bp = jnp.where(take, p, bp)
        mt = mcols[:, t:t + 1] > 0                                   # (B, 1)
        score = jnp.where(mt, best + feats[t * B:(t + 1) * B, 0:T], score)
        bps.append(bp)

    # ---- terminal scores + on-chip backtrack (vectorized one-hot gather) ----
    final = score + end                                              # (B, T)
    iota_t = lax.broadcasted_iota(jnp.int32, (B, T), 1)
    bestv = jnp.max(final, axis=1, keepdims=True)
    cur = jnp.min(jnp.where(final == bestv, iota_t, T), axis=1, keepdims=True)

    tag_cols = [None] * S
    tag_cols[S - 1] = cur
    for t in range(S - 1, 0, -1):
        onehot = (iota_t == cur).astype(jnp.int32)                   # (B, T)
        prev = jnp.sum(bps[t - 1] * onehot, axis=1, keepdims=True)   # bp[t][b, cur]
        mt = mcols[:, t:t + 1] > 0
        cur = jnp.where(mt, prev, cur)                               # hold across padding
        tag_cols[t - 1] = cur

    out = jnp.concatenate(
        [jnp.where(mcols[:, t:t + 1] > 0, tag_cols[t], 0) for t in range(S)],
        axis=1)                                                      # (B, S), padding -> 0
    tag_ref[...] = out


def run_fused(sm, wmm, consts, *, S, B, H, T, VP):
    kern = functools.partial(fused_bilstm_crf_kernel, S=S, B=B, H=H, T=T, VP=VP)
    return pl.pallas_call(
        kern,
        out_shape=jax.ShapeDtypeStruct((B, S), jnp.int32),
        in_specs=[_vmem_spec(), _vmem_spec(), _vmem_spec()],
        out_specs=_vmem_spec(),
    )(sm, wmm, consts)


# ------------------------------- parameters ------------------------------------
def init_params(key):
    ks = jax.random.split(key, 12)

    def rnd(k, shape, scale=0.1):
        return (scale * jax.random.normal(k, shape)).astype(jnp.float32)

    return {
        "embedding": rnd(ks[0], (VOCAB, EMBED)),
        "w_ih_f": rnd(ks[1], (EMBED, 4 * HDIR)),
        "w_hh_f": rnd(ks[2], (HDIR, 4 * HDIR)),
        "b_f": rnd(ks[3], (1, 4 * HDIR)),
        "w_ih_b": rnd(ks[4], (EMBED, 4 * HDIR)),
        "w_hh_b": rnd(ks[5], (HDIR, 4 * HDIR)),
        "b_b": rnd(ks[6], (1, 4 * HDIR)),
        "w_tag": rnd(ks[7], (HIDDEN, TAGS)),
        "b_tag": rnd(ks[8], (1, TAGS)),
        "transitions": rnd(ks[9], (TAGS, TAGS)),
        "start_trans": rnd(ks[10], (1, TAGS)),
        "end_trans": rnd(ks[11], (1, TAGS)),
    }


def _spread_f(w):
    """Place each gate block in the forward-direction columns of the
    [i_f,i_b,f_f,f_b,g_f,g_b,o_f,o_b] stacked layout."""
    z = jnp.zeros((w.shape[0], HDIR), jnp.float32)
    cols = []
    for g in range(4):
        cols.append(w[:, g * HDIR:(g + 1) * HDIR])
        cols.append(z)
    return jnp.concatenate(cols, axis=1)


def _spread_b(w):
    z = jnp.zeros((w.shape[0], HDIR), jnp.float32)
    cols = []
    for g in range(4):
        cols.append(z)
        cols.append(w[:, g * HDIR:(g + 1) * HDIR])
    return jnp.concatenate(cols, axis=1)


def pack_params(p):
    """One-time (init) packing: fold embedding with the input projection,
    stack/interleave both LSTM directions, bf16-cast all matmul weights into a
    single (192,128) block and all f32 constants into a (16,128) block."""
    H2 = 2 * HDIR
    # dropout is identity at inference, so folding embedding @ W_ih is exact
    p_f = p["embedding"] @ _spread_f(p["w_ih_f"])          # (V, 8H)
    p_b = p["embedding"] @ _spread_b(p["w_ih_b"])          # (V, 8H)
    w_hh = jnp.concatenate(
        [_spread_f(p["w_hh_f"]), _spread_b(p["w_hh_b"])], axis=0)      # (2H, 8H)
    w_tag = jnp.pad(p["w_tag"], ((0, 0), (0, GATE - TAGS)))            # (2H, 8H)

    def padrows(x, rows):
        return jnp.pad(x, ((0, rows - x.shape[0]), (0, 0)))

    wmm = jnp.concatenate(
        [padrows(p_f, VPAD), padrows(p_b, VPAD), w_hh, w_tag],
        axis=0).astype(jnp.bfloat16)                                   # (192, 128)
    assert wmm.shape == (WMM_ROWS, GATE)

    def padlane(x):
        return jnp.pad(x, ((0, 0), (0, GATE - x.shape[1])))

    b_in = _spread_f(p["b_f"]) + _spread_b(p["b_b"])                   # (1, 8H)
    consts = jnp.zeros((CONST_ROWS, GATE), jnp.float32)
    consts = consts.at[0:1, :].set(b_in)
    consts = consts.at[1:2, :].set(padlane(p["b_tag"]))
    consts = consts.at[2:3, :].set(padlane(p["start_trans"]))
    consts = consts.at[3:4, :].set(padlane(p["end_trans"]))
    consts = consts.at[TRANS_ROW:TRANS_ROW + TAGS, 0:TAGS].set(p["transitions"])
    return {"wmm": wmm, "consts": consts}


# ------------------------------ forward (glue) ----------------------------------
@jax.jit
def bilstm_crf_forward(packed, sentence, seq_length, mask):
    del seq_length  # encoded in `mask`
    B, S = sentence.shape
    assert B <= BPAD
    # per-call work: one concat + one pad + the fused kernel + one slice
    sm = jnp.concatenate(
        [sentence.astype(jnp.int32), mask.astype(jnp.int32)], axis=1)   # (B, 2S)
    sm = jnp.pad(sm, ((0, BPAD - B), (0, 0)))                           # (BPAD, 2S)
    tags = run_fused(sm, packed["wmm"], packed["consts"],
                     S=S, B=BPAD, H=HDIR, T=TAGS, VP=VPAD)
    return tags[:B]                                                     # (B, S) int32


if __name__ == "__main__":
    key = jax.random.PRNGKey(0)
    pkey, skey = jax.random.split(key)
    params = init_params(pkey)
    packed = pack_params(params)     # one-time weight packing (hoisted out of forward)

    sentence = jax.random.randint(skey, (BATCH, SEQ), 0, VOCAB, dtype=jnp.int32)
    seq_length = jnp.array([SEQ, 5], dtype=jnp.int32)
    mask = (jnp.arange(SEQ)[None, :] < seq_length[:, None]).astype(jnp.int32)  # (B, S)

    tag_seq = bilstm_crf_forward(packed, sentence, seq_length, mask)
    jax.block_until_ready(tag_seq)
    print("KERNEL_OK")
</pallas_src>

<mosaic_0001>
module attributes {stable_mosaic.version = 11 : i64} {
  func.func @fused_bilstm_crf_kernel(%arg0: memref<8x16xi32, #tpu.memory_space<vmem>>, %arg1: memref<192x128xbf16, #tpu.memory_space<vmem>>, %arg2: memref<16x128xf32, #tpu.memory_space<vmem>>, %arg3: memref<8x8xi32, #tpu.memory_space<vmem>>) attributes {dimension_semantics = [], scalar_prefetch = 0 : i64, scratch_operands = 0 : i64, tpu.core_type = #tpu.core_type<tc>} {
    %c0 = arith.constant 0 : index
    %c0_0 = arith.constant 0 : index
    %0 = vector.load %arg0[%c0, %c0_0] : memref<8x16xi32, #tpu.memory_space<vmem>>, vector<8x16xi32>
    %1 = vector.extract_strided_slice %0 {offsets = [0, 0], sizes = [8, 8], strides = [1, 1]} : vector<8x16xi32> to vector<8x8xi32>
    %2 = vector.extract_strided_slice %0 {offsets = [0, 8], sizes = [8, 8], strides = [1, 1]} : vector<8x16xi32> to vector<8x8xi32>
    %c0_1 = arith.constant 0 : index
    %c0_2 = arith.constant 0 : index
    %3 = vector.load %arg2[%c0_1, %c0_2] : memref<16x128xf32, #tpu.memory_space<vmem>>, vector<16x128xf32>
    %4 = vector.extract_strided_slice %3 {offsets = [0, 0], sizes = [1, 128], strides = [1, 1]} : vector<16x128xf32> to vector<1x128xf32>
    %5 = vector.extract_strided_slice %3 {offsets = [1, 0], sizes = [1, 128], strides = [1, 1]} : vector<16x128xf32> to vector<1x128xf32>
    %6 = vector.extract_strided_slice %3 {offsets = [2, 0], sizes = [1, 5], strides = [1, 1]} : vector<16x128xf32> to vector<1x5xf32>
    %7 = vector.extract_strided_slice %3 {offsets = [3, 0], sizes = [1, 5], strides = [1, 1]} : vector<16x128xf32> to vector<1x5xf32>
    %8 = vector.extract_strided_slice %3 {offsets = [8, 0], sizes = [5, 5], strides = [1, 1]} : vector<16x128xf32> to vector<5x5xf32>
    %9 = tpu.iota {dimensions = array<i32: 1>} : vector<8x64xi32>
    %10 = vector.extract_strided_slice %1 {offsets = [0, 0], sizes = [8, 1], strides = [1, 1]} : vector<8x8xi32> to vector<8x1xi32>
    %11 = vector.broadcast %10 : vector<8x1xi32> to vector<8x64xi32>
    %12 = arith.cmpi eq, %11, %9 : vector<8x64xi32>
    %13 = arith.extui %12 : vector<8x64xi1> to vector<8x64xi32>
    %14 = arith.sitofp %13 : vector<8x64xi32> to vector<8x64xf32>
    %15 = vector.extract_strided_slice %1 {offsets = [0, 1], sizes = [8, 1], strides = [1, 1]} : vector<8x8xi32> to vector<8x1xi32>
    %16 = vector.broadcast %15 : vector<8x1xi32> to vector<8x64xi32>
    %17 = arith.cmpi eq, %16, %9 : vector<8x64xi32>
    %18 = arith.extui %17 : vector<8x64xi1> to vector<8x64xi32>
    %19 = arith.sitofp %18 : vector<8x64xi32> to vector<8x64xf32>
    %20 = vector.extract_strided_slice %1 {offsets = [0, 2], sizes = [8, 1], strides = [1, 1]} : vector<8x8xi32> to vector<8x1xi32>
    %21 = vector.broadcast %20 : vector<8x1xi32> to vector<8x64xi32>
    %22 = arith.cmpi eq, %21, %9 : vector<8x64xi32>
    %23 = arith.extui %22 : vector<8x64xi1> to vector<8x64xi32>
    %24 = arith.sitofp %23 : vector<8x64xi32> to vector<8x64xf32>
    %25 = vector.extract_strided_slice %1 {offsets = [0, 3], sizes = [8, 1], strides = [1, 1]} : vector<8x8xi32> to vector<8x1xi32>
    %26 = vector.broadcast %25 : vector<8x1xi32> to vector<8x64xi32>
    %27 = arith.cmpi eq, %26, %9 : vector<8x64xi32>
    %28 = arith.extui %27 : vector<8x64xi1> to vector<8x64xi32>
    %29 = arith.sitofp %28 : vector<8x64xi32> to vector<8x64xf32>
    %30 = vector.extract_strided_slice %1 {offsets = [0, 4], sizes = [8, 1], strides = [1, 1]} : vector<8x8xi32> to vector<8x1xi32>
    %31 = vector.broadcast %30 : vector<8x1xi32> to vector<8x64xi32>
    %32 = arith.cmpi eq, %31, %9 : vector<8x64xi32>
    %33 = arith.extui %32 : vector<8x64xi1> to vector<8x64xi32>
    %34 = arith.sitofp %33 : vector<8x64xi32> to vector<8x64xf32>
    %35 = vector.extract_strided_slice %1 {offsets = [0, 5], sizes = [8, 1], strides = [1, 1]} : vector<8x8xi32> to vector<8x1xi32>
    %36 = vector.broadcast %35 : vector<8x1xi32> to vector<8x64xi32>
    %37 = arith.cmpi eq, %36, %9 : vector<8x64xi32>
    %38 = arith.extui %37 : vector<8x64xi1> to vector<8x64xi32>
    %39 = arith.sitofp %38 : vector<8x64xi32> to vector<8x64xf32>
    %40 = vector.extract_strided_slice %1 {offsets = [0, 6], sizes = [8, 1], strides = [1, 1]} : vector<8x8xi32> to vector<8x1xi32>
    %41 = vector.broadcast %40 : vector<8x1xi32> to vector<8x64xi32>
    %42 = arith.cmpi eq, %41, %9 : vector<8x64xi32>
    %43 = arith.extui %42 : vector<8x64xi1> to vector<8x64xi32>
    %44 = arith.sitofp %43 : vector<8x64xi32> to vector<8x64xf32>
    %45 = vector.extract_strided_slice %1 {offsets = [0, 7], sizes = [8, 1], strides = [1, 1]} : vector<8x8xi32> to vector<8x1xi32>
    %46 = vector.broadcast %45 : vector<8x1xi32> to vector<8x64xi32>
    %47 = arith.cmpi eq, %46, %9 : vector<8x64xi32>
    %48 = arith.extui %47 : vector<8x64xi1> to vector<8x64xi32>
    %49 = arith.sitofp %48 : vector<8x64xi32> to vector<8x64xf32>
    %50 = tpu.concatenate %14, %19, %24, %29, %34, %39, %44, %49 in 0 : vector<8x64xf32>, vector<8x64xf32>, vector<8x64xf32>, vector<8x64xf32>, vector<8x64xf32>, vector<8x64xf32>, vector<8x64xf32>, vector<8x64xf32> -> vector<64x64xf32>
    %51 = arith.truncf %50 : vector<64x64xf32> to vector<64x64xbf16>
    %52 = tpu.concatenate %49, %44, %39, %34, %29, %24, %19, %14 in 0 : vector<8x64xf32>, vector<8x64xf32>, vector<8x64xf32>, vector<8x64xf32>, vector<8x64xf32>, vector<8x64xf32>, vector<8x64xf32>, vector<8x64xf32> -> vector<64x64xf32>
    %53 = arith.truncf %52 : vector<64x64xf32> to vector<64x64xbf16>
    %c0_3 = arith.constant 0 : index
    %c0_4 = arith.constant 0 : index
    %54 = vector.load %arg1[%c0_3, %c0_4] : memref<192x128xbf16, #tpu.memory_space<vmem>>, vector<64x128xbf16>
    %c64 = arith.constant 64 : index
    %c0_5 = arith.constant 0 : index
    %55 = vector.load %arg1[%c64, %c0_5] : memref<192x128xbf16, #tpu.memory_space<vmem>>, vector<64x128xbf16>
    %cst = arith.constant dense<0.000000e+00> : vector<64x128xf32>
    %56 = tpu.matmul %51, %54, %cst {dimension_numbers = #tpu.dot_dimension_numbers<[1], [0], [0], [1], [0, 0, 1, 1], [], []>} : vector<64x64xbf16>, vector<64x128xbf16>, vector<64x128xf32> -> vector<64x128xf32>
    %cst_6 = arith.constant dense<0.000000e+00> : vector<64x128xf32>
    %57 = tpu.matmul %53, %55, %cst_6 {dimension_numbers = #tpu.dot_dimension_numbers<[1], [0], [0], [1], [0, 0, 1, 1], [], []>} : vector<64x64xbf16>, vector<64x128xbf16>, vector<64x128xf32> -> vector<64x128xf32>
    %58 = arith.addf %56, %57 : vector<64x128xf32>
    %59 = vector.broadcast %4 : vector<1x128xf32> to vector<64x128xf32>
    %60 = arith.addf %58, %59 : vector<64x128xf32>
    %c128 = arith.constant 128 : index
    %c0_7 = arith.constant 0 : index
    %61 = vector.load %arg1[%c128, %c0_7] : memref<192x128xbf16, #tpu.memory_space<vmem>>, vector<32x128xbf16>
    %c160 = arith.constant 160 : index
    %c0_8 = arith.constant 0 : index
    %62 = vector.load %arg1[%c160, %c0_8] : memref<192x128xbf16, #tpu.memory_space<vmem>>, vector<32x128xbf16>
    %63 = tpu.iota {dimensions = array<i32: 1>} : vector<8x128xi32>
    %c64_i32 = arith.constant 64 : i32
    %64 = vector.broadcast %c64_i32 : i32 to vector<8x128xi32>
    %65 = arith.cmpi sge, %63, %64 : vector<8x128xi32>
    %c96_i32 = arith.constant 96 : i32
    %66 = vector.broadcast %c96_i32 : i32 to vector<8x128xi32>
    %67 = arith.cmpi slt, %63, %66 : vector<8x128xi32>
    %68 = arith.andi %65, %67 : vector<8x128xi1>
    %69 = tpu.iota {dimensions = array<i32: 1>} : vector<8x32xi32>
    %c16_i32 = arith.constant 16 : i32
    %70 = vector.broadcast %c16_i32 : i32 to vector<8x32xi32>
    %71 = arith.cmpi slt, %69, %70 : vector<8x32xi32>
    %cst_9 = arith.constant 0.000000e+00 : f32
    %72 = vector.broadcast %cst_9 : f32 to vector<8x32xf32>
    %cst_10 = arith.constant 0.000000e+00 : f32
    %73 = vector.broadcast %cst_10 : f32 to vector<8x32xf32>
    %74 = vector.extract_strided_slice %60 {offsets = [0, 0], sizes = [8, 128], strides = [1, 1]} : vector<64x128xf32> to vector<8x128xf32>
    %75 = arith.truncf %72 : vector<8x32xf32> to vector<8x32xbf16>
    %cst_11 = arith.constant dense<0.000000e+00> : vector<8x128xf32>
    %76 = tpu.matmul %75, %61, %cst_11 {dimension_numbers = #tpu.dot_dimension_numbers<[1], [0], [0], [1], [0, 0, 1, 1], [], []>} : vector<8x32xbf16>, vector<32x128xbf16>, vector<8x128xf32> -> vector<8x128xf32>
    %77 = arith.addf %74, %76 : vector<8x128xf32>
    %78 = math.tanh %77 : vector<8x128xf32>
    %79 = arith.negf %77 : vector<8x128xf32>
    %80 = math.exp %79 : vector<8x128xf32>
    %cst_12 = arith.constant 1.000000e+00 : f32
    %81 = vector.broadcast %cst_12 : f32 to vector<8x128xf32>
    %82 = arith.addf %81, %80 : vector<8x128xf32>
    %83 = arith.divf %81, %82 : vector<8x128xf32>
    %84 = arith.select %68, %78, %83 : vector<8x128xi1>, vector<8x128xf32>
    %85 = vector.extract_strided_slice %84 {offsets = [0, 0], sizes = [8, 32], strides = [1, 1]} : vector<8x128xf32> to vector<8x32xf32>
    %86 = vector.extract_strided_slice %84 {offsets = [0, 32], sizes = [8, 32], strides = [1, 1]} : vector<8x128xf32> to vector<8x32xf32>
    %87 = vector.extract_strided_slice %84 {offsets = [0, 64], sizes = [8, 32], strides = [1, 1]} : vector<8x128xf32> to vector<8x32xf32>
    %88 = vector.extract_strided_slice %84 {offsets = [0, 96], sizes = [8, 32], strides = [1, 1]} : vector<8x128xf32> to vector<8x32xf32>
    %89 = vector.extract_strided_slice %2 {offsets = [0, 7], sizes = [8, 1], strides = [1, 1]} : vector<8x8xi32> to vector<8x1xi32>
    %c0_i32 = arith.constant 0 : i32
    %90 = vector.broadcast %c0_i32 : i32 to vector<8x1xi32>
    %91 = arith.cmpi sgt, %89, %90 : vector<8x1xi32>
    %92 = arith.extui %91 : vector<8x1xi1> to vector<8x1xi32>
    %93 = arith.sitofp %92 : vector<8x1xi32> to vector<8x1xf32>
    %cst_13 = arith.constant 1.000000e+00 : f32
    %94 = vector.broadcast %cst_13 : f32 to vector<8x32xf32>
    %95 = vector.shape_cast %93 : vector<8x1xf32> to vector<8x1xf32>
    %96 = vector.broadcast %95 : vector<8x1xf32> to vector<8x32xf32>
    %97 = arith.select %71, %94, %96 : vector<8x32xi1>, vector<8x32xf32>
    %98 = arith.mulf %86, %73 : vector<8x32xf32>
    %99 = arith.mulf %85, %87 : vector<8x32xf32>
    %100 = arith.addf %98, %99 : vector<8x32xf32>
    %101 = arith.mulf %97, %100 : vector<8x32xf32>
    %102 = math.tanh %101 : vector<8x32xf32>
    %103 = arith.mulf %88, %102 : vector<8x32xf32>
    %104 = arith.mulf %97, %103 : vector<8x32xf32>
    %105 = vector.extract_strided_slice %60 {offsets = [8, 0], sizes = [8, 128], strides = [1, 1]} : vector<64x128xf32> to vector<8x128xf32>
    %106 = arith.truncf %104 : vector<8x32xf32> to vector<8x32xbf16>
    %cst_14 = arith.constant dense<0.000000e+00> : vector<8x128xf32>
    %107 = tpu.matmul %106, %61, %cst_14 {dimension_numbers = #tpu.dot_dimension_numbers<[1], [0], [0], [1], [0, 0, 1, 1], [], []>} : vector<8x32xbf16>, vector<32x128xbf16>, vector<8x128xf32> -> vector<8x128xf32>
    %108 = arith.addf %105, %107 : vector<8x128xf32>
    %109 = math.tanh %108 : vector<8x128xf32>
    %110 = arith.negf %108 : vector<8x128xf32>
    %111 = math.exp %110 : vector<8x128xf32>
    %cst_15 = arith.constant 1.000000e+00 : f32
    %112 = vector.broadcast %cst_15 : f32 to vector<8x128xf32>
    %113 = arith.addf %112, %111 : vector<8x128xf32>
    %114 = arith.divf %112, %113 : vector<8x128xf32>
    %115 = arith.select %68, %109, %114 : vector<8x128xi1>, vector<8x128xf32>
    %116 = vector.extract_strided_slice %115 {offsets = [0, 0], sizes = [8, 32], strides = [1, 1]} : vector<8x128xf32> to vector<8x32xf32>
    %117 = vector.extract_strided_slice %115 {offsets = [0, 32], sizes = [8, 32], strides = [1, 1]} : vector<8x128xf32> to vector<8x32xf32>
    %118 = vector.extract_strided_slice %115 {offsets = [0, 64], sizes = [8, 32], strides = [1, 1]} : vector<8x128xf32> to vector<8x32xf32>
    %119 = vector.extract_strided_slice %115 {offsets = [0, 96], sizes = [8, 32], strides = [1, 1]} : vector<8x128xf32> to vector<8x32xf32>
    %120 = vector.extract_strided_slice %2 {offsets = [0, 6], sizes = [8, 1], strides = [1, 1]} : vector<8x8xi32> to vector<8x1xi32>
    %c0_i32_16 = arith.constant 0 : i32
    %121 = vector.broadcast %c0_i32_16 : i32 to vector<8x1xi32>
    %122 = arith.cmpi sgt, %120, %121 : vector<8x1xi32>
    %123 = arith.extui %122 : vector<8x1xi1> to vector<8x1xi32>
    %124 = arith.sitofp %123 : vector<8x1xi32> to vector<8x1xf32>
    %cst_17 = arith.constant 1.000000e+00 : f32
    %125 = vector.broadcast %cst_17 : f32 to vector<8x32xf32>
    %126 = vector.shape_cast %124 : vector<8x1xf32> to vector<8x1xf32>
    %127 = vector.broadcast %126 : vector<8x1xf32> to vector<8x32xf32>
    %128 = arith.select %71, %125, %127 : vector<8x32xi1>, vector<8x32xf32>
    %129 = arith.mulf %117, %101 : vector<8x32xf32>
    %130 = arith.mulf %116, %118 : vector<8x32xf32>
    %131 = arith.addf %129, %130 : vector<8x32xf32>
    %132 = arith.mulf %128, %131 : vector<8x32xf32>
    %133 = math.tanh %132 : vector<8x32xf32>
    %134 = arith.mulf %119, %133 : vector<8x32xf32>
    %135 = arith.mulf %128, %134 : vector<8x32xf32>
    %136 = vector.extract_strided_slice %60 {offsets = [16, 0], sizes = [8, 128], strides = [1, 1]} : vector<64x128xf32> to vector<8x128xf32>
    %137 = arith.truncf %135 : vector<8x32xf32> to vector<8x32xbf16>
    %cst_18 = arith.constant dense<0.000000e+00> : vector<8x128xf32>
    %138 = tpu.matmul %137, %61, %cst_18 {dimension_numbers = #tpu.dot_dimension_numbers<[1], [0], [0], [1], [0, 0, 1, 1], [], []>} : vector<8x32xbf16>, vector<32x128xbf16>, vector<8x128xf32> -> vector<8x128xf32>
    %139 = arith.addf %136, %138 : vector<8x128xf32>
    %140 = math.tanh %139 : vector<8x128xf32>
    %141 = arith.negf %139 : vector<8x128xf32>
    %142 = math.exp %141 : vector<8x128xf32>
    %cst_19 = arith.constant 1.000000e+00 : f32
    %143 = vector.broadcast %cst_19 : f32 to vector<8x128xf32>
    %144 = arith.addf %143, %142 : vector<8x128xf32>
    %145 = arith.divf %143, %144 : vector<8x128xf32>
    %146 = arith.select %68, %140, %145 : vector<8x128xi1>, vector<8x128xf32>
    %147 = vector.extract_strided_slice %146 {offsets = [0, 0], sizes = [8, 32], strides = [1, 1]} : vector<8x128xf32> to vector<8x32xf32>
    %148 = vector.extract_strided_slice %146 {offsets = [0, 32], sizes = [8, 32], strides = [1, 1]} : vector<8x128xf32> to vector<8x32xf32>
    %149 = vector.extract_strided_slice %146 {offsets = [0, 64], sizes = [8, 32], strides = [1, 1]} : vector<8x128xf32> to vector<8x32xf32>
    %150 = vector.extract_strided_slice %146 {offsets = [0, 96], sizes = [8, 32], strides = [1, 1]} : vector<8x128xf32> to vector<8x32xf32>
    %151 = vector.extract_strided_slice %2 {offsets = [0, 5], sizes = [8, 1], strides = [1, 1]} : vector<8x8xi32> to vector<8x1xi32>
    %c0_i32_20 = arith.constant 0 : i32
    %152 = vector.broadcast %c0_i32_20 : i32 to vector<8x1xi32>
    %153 = arith.cmpi sgt, %151, %152 : vector<8x1xi32>
    %154 = arith.extui %153 : vector<8x1xi1> to vector<8x1xi32>
    %155 = arith.sitofp %154 : vector<8x1xi32> to vector<8x1xf32>
    %cst_21 = arith.constant 1.000000e+00 : f32
    %156 = vector.broadcast %cst_21 : f32 to vector<8x32xf32>
    %157 = vector.shape_cast %155 : vector<8x1xf32> to vector<8x1xf32>
    %158 = vector.broadcast %157 : vector<8x1xf32> to vector<8x32xf32>
    %159 = arith.select %71, %156, %158 : vector<8x32xi1>, vector<8x32xf32>
    %160 = arith.mulf %148, %132 : vector<8x32xf32>
    %161 = arith.mulf %147, %149 : vector<8x32xf32>
    %162 = arith.addf %160, %161 : vector<8x32xf32>
    %163 = arith.mulf %159, %162 : vector<8x32xf32>
    %164 = math.tanh %163 : vector<8x32xf32>
    %165 = arith.mulf %150, %164 : vector<8x32xf32>
    %166 = arith.mulf %159, %165 : vector<8x32xf32>
    %167 = vector.extract_strided_slice %60 {offsets = [24, 0], sizes = [8, 128], strides = [1, 1]} : vector<64x128xf32> to vector<8x128xf32>
    %168 = arith.truncf %166 : vector<8x32xf32> to vector<8x32xbf16>
    %cst_22 = arith.constant dense<0.000000e+00> : vector<8x128xf32>
    %169 = tpu.matmul %168, %61, %cst_22 {dimension_numbers = #tpu.dot_dimension_numbers<[1], [0], [0], [1], [0, 0, 1, 1], [], []>} : vector<8x32xbf16>, vector<32x128xbf16>, vector<8x128xf32> -> vector<8x128xf32>
    %170 = arith.addf %167, %169 : vector<8x128xf32>
    %171 = math.tanh %170 : vector<8x128xf32>
    %172 = arith.negf %170 : vector<8x128xf32>
    %173 = math.exp %172 : vector<8x128xf32>
    %cst_23 = arith.constant 1.000000e+00 : f32
    %174 = vector.broadcast %cst_23 : f32 to vector<8x128xf32>
    %175 = arith.addf %174, %173 : vector<8x128xf32>
    %176 = arith.divf %174, %175 : vector<8x128xf32>
    %177 = arith.select %68, %171, %176 : vector<8x128xi1>, vector<8x128xf32>
    %178 = vector.extract_strided_slice %177 {offsets = [0, 0], sizes = [8, 32], strides = [1, 1]} : vector<8x128xf32> to vector<8x32xf32>
    %179 = vector.extract_strided_slice %177 {offsets = [0, 32], sizes = [8, 32], strides = [1, 1]} : vector<8x128xf32> to vector<8x32xf32>
    %180 = vector.extract_strided_slice %177 {offsets = [0, 64], sizes = [8, 32], strides = [1, 1]} : vector<8x128xf32> to vector<8x32xf32>
    %181 = vector.extract_strided_slice %177 {offsets = [0, 96], sizes = [8, 32], strides = [1, 1]} : vector<8x128xf32> to vector<8x32xf32>
    %182 = vector.extract_strided_slice %2 {offsets = [0, 4], sizes = [8, 1], strides = [1, 1]} : vector<8x8xi32> to vector<8x1xi32>
    %c0_i32_24 = arith.constant 0 : i32
    %183 = vector.broadcast %c0_i32_24 : i32 to vector<8x1xi32>
    %184 = arith.cmpi sgt, %182, %183 : vector<8x1xi32>
    %185 = arith.extui %184 : vector<8x1xi1> to vector<8x1xi32>
    %186 = arith.sitofp %185 : vector<8x1xi32> to vector<8x1xf32>
    %cst_25 = arith.constant 1.000000e+00 : f32
    %187 = vector.broadcast %cst_25 : f32 to vector<8x32xf32>
    %188 = vector.shape_cast %186 : vector<8x1xf32> to vector<8x1xf32>
    %189 = vector.broadcast %188 : vector<8x1xf32> to vector<8x32xf32>
    %190 = arith.select %71, %187, %189 : vector<8x32xi1>, vector<8x32xf32>
    %191 = arith.mulf %179, %163 : vector<8x32xf32>
    %192 = arith.mulf %178, %180 : vector<8x32xf32>
    %193 = arith.addf %191, %192 : vector<8x32xf32>
    %194 = arith.mulf %190, %193 : vector<8x32xf32>
    %195 = math.tanh %194 : vector<8x32xf32>
    %196 = arith.mulf %181, %195 : vector<8x32xf32>
    %197 = arith.mulf %190, %196 : vector<8x32xf32>
    %198 = vector.extract_strided_slice %60 {offsets = [32, 0], sizes = [8, 128], strides = [1, 1]} : vector<64x128xf32> to vector<8x128xf32>
    %199 = arith.truncf %197 : vector<8x32xf32> to vector<8x32xbf16>
    %cst_26 = arith.constant dense<0.000000e+00> : vector<8x128xf32>
    %200 = tpu.matmul %199, %61, %cst_26 {dimension_numbers = #tpu.dot_dimension_numbers<[1], [0], [0], [1], [0, 0, 1, 1], [], []>} : vector<8x32xbf16>, vector<32x128xbf16>, vector<8x128xf32> -> vector<8x128xf32>
    %201 = arith.addf %198, %200 : vector<8x128xf32>
    %202 = math.tanh %201 : vector<8x128xf32>
    %203 = arith.negf %201 : vector<8x128xf32>
    %204 = math.exp %203 : vector<8x128xf32>
    %cst_27 = arith.constant 1.000000e+00 : f32
    %205 = vector.broadcast %cst_27 : f32 to vector<8x128xf32>
    %206 = arith.addf %205, %204 : vector<8x128xf32>
    %207 = arith.divf %205, %206 : vector<8x128xf32>
    %208 = arith.select %68, %202, %207 : vector<8x128xi1>, vector<8x128xf32>
    %209 = vector.extract_strided_slice %208 {offsets = [0, 0], sizes = [8, 32], strides = [1, 1]} : vector<8x128xf32> to vector<8x32xf32>
    %210 = vector.extract_strided_slice %208 {offsets = [0, 32], sizes = [8, 32], strides = [1, 1]} : vector<8x128xf32> to vector<8x32xf32>
    %211 = vector.extract_strided_slice %208 {offsets = [0, 64], sizes = [8, 32], strides = [1, 1]} : vector<8x128xf32> to vector<8x32xf32>
    %212 = vector.extract_strided_slice %208 {offsets = [0, 96], sizes = [8, 32], strides = [1, 1]} : vector<8x128xf32> to vector<8x32xf32>
    %213 = vector.extract_strided_slice %2 {offsets = [0, 3], sizes = [8, 1], strides = [1, 1]} : vector<8x8xi32> to vector<8x1xi32>
    %c0_i32_28 = arith.constant 0 : i32
    %214 = vector.broadcast %c0_i32_28 : i32 to vector<8x1xi32>
    %215 = arith.cmpi sgt, %213, %214 : vector<8x1xi32>
    %216 = arith.extui %215 : vector<8x1xi1> to vector<8x1xi32>
    %217 = arith.sitofp %216 : vector<8x1xi32> to vector<8x1xf32>
    %cst_29 = arith.constant 1.000000e+00 : f32
    %218 = vector.broadcast %cst_29 : f32 to vector<8x32xf32>
    %219 = vector.shape_cast %217 : vector<8x1xf32> to vector<8x1xf32>
    %220 = vector.broadcast %219 : vector<8x1xf32> to vector<8x32xf32>
    %221 = arith.select %71, %218, %220 : vector<8x32xi1>, vector<8x32xf32>
    %222 = arith.mulf %210, %194 : vector<8x32xf32>
    %223 = arith.mulf %209, %211 : vector<8x32xf32>
    %224 = arith.addf %222, %223 : vector<8x32xf32>
    %225 = arith.mulf %221, %224 : vector<8x32xf32>
    %226 = math.tanh %225 : vector<8x32xf32>
    %227 = arith.mulf %212, %226 : vector<8x32xf32>
    %228 = arith.mulf %221, %227 : vector<8x32xf32>
    %229 = vector.extract_strided_slice %60 {offsets = [40, 0], sizes = [8, 128], strides = [1, 1]} : vector<64x128xf32> to vector<8x128xf32>
    %230 = arith.truncf %228 : vector<8x32xf32> to vector<8x32xbf16>
    %cst_30 = arith.constant dense<0.000000e+00> : vector<8x128xf32>
    %231 = tpu.matmul %230, %61, %cst_30 {dimension_numbers = #tpu.dot_dimension_numbers<[1], [0], [0], [1], [0, 0, 1, 1], [], []>} : vector<8x32xbf16>, vector<32x128xbf16>, vector<8x128xf32> -> vector<8x128xf32>
    %232 = arith.addf %229, %231 : vector<8x128xf32>
    %233 = math.tanh %232 : vector<8x128xf32>
    %234 = arith.negf %232 : vector<8x128xf32>
    %235 = math.exp %234 : vector<8x128xf32>
    %cst_31 = arith.constant 1.000000e+00 : f32
    %236 = vector.broadcast %cst_31 : f32 to vector<8x128xf32>
    %237 = arith.addf %236, %235 : vector<8x128xf32>
    %238 = arith.divf %236, %237 : vector<8x128xf32>
    %239 = arith.select %68, %233, %238 : vector<8x128xi1>, vector<8x128xf32>
    %240 = vector.extract_strided_slice %239 {offsets = [0, 0], sizes = [8, 32], strides = [1, 1]} : vector<8x128xf32> to vector<8x32xf32>
    %241 = vector.extract_strided_slice %239 {offsets = [0, 32], sizes = [8, 32], strides = [1, 1]} : vector<8x128xf32> to vector<8x32xf32>
    %242 = vector.extract_strided_slice %239 {offsets = [0, 64], sizes = [8, 32], strides = [1, 1]} : vector<8x128xf32> to vector<8x32xf32>
    %243 = vector.extract_strided_slice %239 {offsets = [0, 96], sizes = [8, 32], strides = [1, 1]} : vector<8x128xf32> to vector<8x32xf32>
    %244 = vector.extract_strided_slice %2 {offsets = [0, 2], sizes = [8, 1], strides = [1, 1]} : vector<8x8xi32> to vector<8x1xi32>
    %c0_i32_32 = arith.constant 0 : i32
    %245 = vector.broadcast %c0_i32_32 : i32 to vector<8x1xi32>
    %246 = arith.cmpi sgt, %244, %245 : vector<8x1xi32>
    %247 = arith.extui %246 : vector<8x1xi1> to vector<8x1xi32>
    %248 = arith.sitofp %247 : vector<8x1xi32> to vector<8x1xf32>
    %cst_33 = arith.constant 1.000000e+00 : f32
    %249 = vector.broadcast %cst_33 : f32 to vector<8x32xf32>
    %250 = vector.shape_cast %248 : vector<8x1xf32> to vector<8x1xf32>
    %251 = vector.broadcast %250 : vector<8x1xf32> to vector<8x32xf32>
    %252 = arith.select %71, %249, %251 : vector<8x32xi1>, vector<8x32xf32>
    %253 = arith.mulf %241, %225 : vector<8x32xf32>
    %254 = arith.mulf %240, %242 : vector<8x32xf32>
    %255 = arith.addf %253, %254 : vector<8x32xf32>
    %256 = arith.mulf %252, %255 : vector<8x32xf32>
    %257 = math.tanh %256 : vector<8x32xf32>
    %258 = arith.mulf %243, %257 : vector<8x32xf32>
    %259 = arith.mulf %252, %258 : vector<8x32xf32>
    %260 = vector.extract_strided_slice %60 {offsets = [48, 0], sizes = [8, 128], strides = [1, 1]} : vector<64x128xf32> to vector<8x128xf32>
    %261 = arith.truncf %259 : vector<8x32xf32> to vector<8x32xbf16>
    %cst_34 = arith.constant dense<0.000000e+00> : vector<8x128xf32>
    %262 = tpu.matmul %261, %61, %cst_34 {dimension_numbers = #tpu.dot_dimension_numbers<[1], [0], [0], [1], [0, 0, 1, 1], [], []>} : vector<8x32xbf16>, vector<32x128xbf16>, vector<8x128xf32> -> vector<8x128xf32>
    %263 = arith.addf %260, %262 : vector<8x128xf32>
    %264 = math.tanh %263 : vector<8x128xf32>
    %265 = arith.negf %263 : vector<8x128xf32>
    %266 = math.exp %265 : vector<8x128xf32>
    %cst_35 = arith.constant 1.000000e+00 : f32
    %267 = vector.broadcast %cst_35 : f32 to vector<8x128xf32>
    %268 = arith.addf %267, %266 : vector<8x128xf32>
    %269 = arith.divf %267, %268 : vector<8x128xf32>
    %270 = arith.select %68, %264, %269 : vector<8x128xi1>, vector<8x128xf32>
    %271 = vector.extract_strided_slice %270 {offsets = [0, 0], sizes = [8, 32], strides = [1, 1]} : vector<8x128xf32> to vector<8x32xf32>
    %272 = vector.extract_strided_slice %270 {offsets = [0, 32], sizes = [8, 32], strides = [1, 1]} : vector<8x128xf32> to vector<8x32xf32>
    %273 = vector.extract_strided_slice %270 {offsets = [0, 64], sizes = [8, 32], strides = [1, 1]} : vector<8x128xf32> to vector<8x32xf32>
    %274 = vector.extract_strided_slice %270 {offsets = [0, 96], sizes = [8, 32], strides = [1, 1]} : vector<8x128xf32> to vector<8x32xf32>
    %275 = vector.extract_strided_slice %2 {offsets = [0, 1], sizes = [8, 1], strides = [1, 1]} : vector<8x8xi32> to vector<8x1xi32>
    %c0_i32_36 = arith.constant 0 : i32
    %276 = vector.broadcast %c0_i32_36 : i32 to vector<8x1xi32>
    %277 = arith.cmpi sgt, %275, %276 : vector<8x1xi32>
    %278 = arith.extui %277 : vector<8x1xi1> to vector<8x1xi32>
    %279 = arith.sitofp %278 : vector<8x1xi32> to vector<8x1xf32>
    %cst_37 = arith.constant 1.000000e+00 : f32
    %280 = vector.broadcast %cst_37 : f32 to vector<8x32xf32>
    %281 = vector.shape_cast %279 : vector<8x1xf32> to vector<8x1xf32>
    %282 = vector.broadcast %281 : vector<8x1xf32> to vector<8x32xf32>
    %283 = arith.select %71, %280, %282 : vector<8x32xi1>, vector<8x32xf32>
    %284 = arith.mulf %272, %256 : vector<8x32xf32>
    %285 = arith.mulf %271, %273 : vector<8x32xf32>
    %286 = arith.addf %284, %285 : vector<8x32xf32>
    %287 = arith.mulf %283, %286 : vector<8x32xf32>
    %288 = math.tanh %287 : vector<8x32xf32>
    %289 = arith.mulf %274, %288 : vector<8x32xf32>
    %290 = arith.mulf %283, %289 : vector<8x32xf32>
    %291 = vector.extract_strided_slice %60 {offsets = [56, 0], sizes = [8, 128], strides = [1, 1]} : vector<64x128xf32> to vector<8x128xf32>
    %292 = arith.truncf %290 : vector<8x32xf32> to vector<8x32xbf16>
    %cst_38 = arith.constant dense<0.000000e+00> : vector<8x128xf32>
    %293 = tpu.matmul %292, %61, %cst_38 {dimension_numbers = #tpu.dot_dimension_numbers<[1], [0], [0], [1], [0, 0, 1, 1], [], []>} : vector<8x32xbf16>, vector<32x128xbf16>, vector<8x128xf32> -> vector<8x128xf32>
    %294 = arith.addf %291, %293 : vector<8x128xf32>
    %295 = math.tanh %294 : vector<8x128xf32>
    %296 = arith.negf %294 : vector<8x128xf32>
    %297 = math.exp %296 : vector<8x128xf32>
    %cst_39 = arith.constant 1.000000e+00 : f32
    %298 = vector.broadcast %cst_39 : f32 to vector<8x128xf32>
    %299 = arith.addf %298, %297 : vector<8x128xf32>
    %300 = arith.divf %298, %299 : vector<8x128xf32>
    %301 = arith.select %68, %295, %300 : vector<8x128xi1>, vector<8x128xf32>
    %302 = vector.extract_strided_slice %301 {offsets = [0, 0], sizes = [8, 32], strides = [1, 1]} : vector<8x128xf32> to vector<8x32xf32>
    %303 = vector.extract_strided_slice %301 {offsets = [0, 32], sizes = [8, 32], strides = [1, 1]} : vector<8x128xf32> to vector<8x32xf32>
    %304 = vector.extract_strided_slice %301 {offsets = [0, 64], sizes = [8, 32], strides = [1, 1]} : vector<8x128xf32> to vector<8x32xf32>
    %305 = vector.extract_strided_slice %301 {offsets = [0, 96], sizes = [8, 32], strides = [1, 1]} : vector<8x128xf32> to vector<8x32xf32>
    %306 = vector.extract_strided_slice %2 {offsets = [0, 0], sizes = [8, 1], strides = [1, 1]} : vector<8x8xi32> to vector<8x1xi32>
    %c0_i32_40 = arith.constant 0 : i32
    %307 = vector.broadcast %c0_i32_40 : i32 to vector<8x1xi32>
    %308 = arith.cmpi sgt, %306, %307 : vector<8x1xi32>
    %309 = arith.extui %308 : vector<8x1xi1> to vector<8x1xi32>
    %310 = arith.sitofp %309 : vector<8x1xi32> to vector<8x1xf32>
    %cst_41 = arith.constant 1.000000e+00 : f32
    %311 = vector.broadcast %cst_41 : f32 to vector<8x32xf32>
    %312 = vector.shape_cast %310 : vector<8x1xf32> to vector<8x1xf32>
    %313 = vector.broadcast %312 : vector<8x1xf32> to vector<8x32xf32>
    %314 = arith.select %71, %311, %313 : vector<8x32xi1>, vector<8x32xf32>
    %315 = arith.mulf %303, %287 : vector<8x32xf32>
    %316 = arith.mulf %302, %304 : vector<8x32xf32>
    %317 = arith.addf %315, %316 : vector<8x32xf32>
    %318 = arith.mulf %314, %317 : vector<8x32xf32>
    %319 = math.tanh %318 : vector<8x32xf32>
    %320 = arith.mulf %305, %319 : vector<8x32xf32>
    %321 = arith.mulf %314, %320 : vector<8x32xf32>
    %322 = arith.select %71, %104, %321 : vector<8x32xi1>, vector<8x32xf32>
    %323 = arith.select %71, %135, %290 : vector<8x32xi1>, vector<8x32xf32>
    %324 = arith.select %71, %166, %259 : vector<8x32xi1>, vector<8x32xf32>
    %325 = arith.select %71, %197, %228 : vector<8x32xi1>, vector<8x32xf32>
    %326 = arith.select %71, %228, %197 : vector<8x32xi1>, vector<8x32xf32>
    %327 = arith.select %71, %259, %166 : vector<8x32xi1>, vector<8x32xf32>
    %328 = arith.select %71, %290, %135 : vector<8x32xi1>, vector<8x32xf32>
    %329 = arith.select %71, %321, %104 : vector<8x32xi1>, vector<8x32xf32>
    %330 = tpu.concatenate %322, %323, %324, %325, %326, %327, %328, %329 in 0 : vector<8x32xf32>, vector<8x32xf32>, vector<8x32xf32>, vector<8x32xf32>, vector<8x32xf32>, vector<8x32xf32>, vector<8x32xf32>, vector<8x32xf32> -> vector<64x32xf32>
    %331 = arith.truncf %330 : vector<64x32xf32> to vector<64x32xbf16>
    %cst_42 = arith.constant dense<0.000000e+00> : vector<64x128xf32>
    %332 = tpu.matmul %331, %62, %cst_42 {dimension_numbers = #tpu.dot_dimension_numbers<[1], [0], [0], [1], [0, 0, 1, 1], [], []>} : vector<64x32xbf16>, vector<32x128xbf16>, vector<64x128xf32> -> vector<64x128xf32>
    %333 = vector.broadcast %5 : vector<1x128xf32> to vector<64x128xf32>
    %334 = arith.addf %332, %333 : vector<64x128xf32>
    %335 = vector.extract_strided_slice %334 {offsets = [0, 0], sizes = [8, 5], strides = [1, 1]} : vector<64x128xf32> to vector<8x5xf32>
    %336 = vector.broadcast %6 : vector<1x5xf32> to vector<8x5xf32>
    %337 = arith.addf %336, %335 : vector<8x5xf32>
    %338 = vector.extract_strided_slice %337 {offsets = [0, 0], sizes = [8, 1], strides = [1, 1]} : vector<8x5xf32> to vector<8x1xf32>
    %339 = vector.extract_strided_slice %8 {offsets = [0, 0], sizes = [1, 5], strides = [1, 1]} : vector<5x5xf32> to vector<1x5xf32>
    %340 = vector.broadcast %338 : vector<8x1xf32> to vector<8x5xf32>
    %341 = vector.broadcast %339 : vector<1x5xf32> to vector<8x5xf32>
    %342 = arith.addf %340, %341 : vector<8x5xf32>
    %c0_i32_43 = arith.constant 0 : i32
    %343 = vector.broadcast %c0_i32_43 : i32 to vector<8x5xi32>
    %344 = vector.extract_strided_slice %337 {offsets = [0, 1], sizes = [8, 1], strides = [1, 1]} : vector<8x5xf32> to vector<8x1xf32>
    %345 = vector.extract_strided_slice %8 {offsets = [1, 0], sizes = [1, 5], strides = [1, 1]} : vector<5x5xf32> to vector<1x5xf32>
    %346 = vector.broadcast %344 : vector<8x1xf32> to vector<8x5xf32>
    %347 = vector.broadcast %345 : vector<1x5xf32> to vector<8x5xf32>
    %348 = arith.addf %346, %347 : vector<8x5xf32>
    %349 = arith.cmpf ogt, %348, %342 : vector<8x5xf32>
    %350 = arith.select %349, %348, %342 : vector<8x5xi1>, vector<8x5xf32>
    %c1_i32 = arith.constant 1 : i32
    %351 = vector.broadcast %c1_i32 : i32 to vector<8x5xi32>
    %352 = arith.select %349, %351, %343 : vector<8x5xi1>, vector<8x5xi32>
    %353 = vector.extract_strided_slice %337 {offsets = [0, 2], sizes = [8, 1], strides = [1, 1]} : vector<8x5xf32> to vector<8x1xf32>
    %354 = vector.extract_strided_slice %8 {offsets = [2, 0], sizes = [1, 5], strides = [1, 1]} : vector<5x5xf32> to vector<1x5xf32>
    %355 = vector.broadcast %353 : vector<8x1xf32> to vector<8x5xf32>
    %356 = vector.broadcast %354 : vector<1x5xf32> to vector<8x5xf32>
    %357 = arith.addf %355, %356 : vector<8x5xf32>
    %358 = arith.cmpf ogt, %357, %350 : vector<8x5xf32>
    %359 = arith.select %358, %357, %350 : vector<8x5xi1>, vector<8x5xf32>
    %c2_i32 = arith.constant 2 : i32
    %360 = vector.broadcast %c2_i32 : i32 to vector<8x5xi32>
    %361 = arith.select %358, %360, %352 : vector<8x5xi1>, vector<8x5xi32>
    %362 = vector.extract_strided_slice %337 {offsets = [0, 3], sizes = [8, 1], strides = [1, 1]} : vector<8x5xf32> to vector<8x1xf32>
    %363 = vector.extract_strided_slice %8 {offsets = [3, 0], sizes = [1, 5], strides = [1, 1]} : vector<5x5xf32> to vector<1x5xf32>
    %364 = vector.broadcast %362 : vector<8x1xf32> to vector<8x5xf32>
    %365 = vector.broadcast %363 : vector<1x5xf32> to vector<8x5xf32>
    %366 = arith.addf %364, %365 : vector<8x5xf32>
    %367 = arith.cmpf ogt, %366, %359 : vector<8x5xf32>
    %368 = arith.select %367, %366, %359 : vector<8x5xi1>, vector<8x5xf32>
    %c3_i32 = arith.constant 3 : i32
    %369 = vector.broadcast %c3_i32 : i32 to vector<8x5xi32>
    %370 = arith.select %367, %369, %361 : vector<8x5xi1>, vector<8x5xi32>
    %371 = vector.extract_strided_slice %337 {offsets = [0, 4], sizes = [8, 1], strides = [1, 1]} : vector<8x5xf32> to vector<8x1xf32>
    %372 = vector.extract_strided_slice %8 {offsets = [4, 0], sizes = [1, 5], strides = [1, 1]} : vector<5x5xf32> to vector<1x5xf32>
    %373 = vector.broadcast %371 : vector<8x1xf32> to vector<8x5xf32>
    %374 = vector.broadcast %372 : vector<1x5xf32> to vector<8x5xf32>
    %375 = arith.addf %373, %374 : vector<8x5xf32>
    %376 = arith.cmpf ogt, %375, %368 : vector<8x5xf32>
    %377 = arith.select %376, %375, %368 : vector<8x5xi1>, vector<8x5xf32>
    %c4_i32 = arith.constant 4 : i32
    %378 = vector.broadcast %c4_i32 : i32 to vector<8x5xi32>
    %379 = arith.select %376, %378, %370 : vector<8x5xi1>, vector<8x5xi32>
    %380 = vector.extract_strided_slice %2 {offsets = [0, 1], sizes = [8, 1], strides = [1, 1]} : vector<8x8xi32> to vector<8x1xi32>
    %c0_i32_44 = arith.constant 0 : i32
    %381 = vector.broadcast %c0_i32_44 : i32 to vector<8x1xi32>
    %382 = arith.cmpi sgt, %380, %381 : vector<8x1xi32>
    %383 = vector.extract_strided_slice %334 {offsets = [8, 0], sizes = [8, 5], strides = [1, 1]} : vector<64x128xf32> to vector<8x5xf32>
    %384 = arith.addf %377, %383 : vector<8x5xf32>
    %385 = vector.shape_cast %382 : vector<8x1xi1> to vector<8x1xi1>
    %386 = vector.broadcast %385 : vector<8x1xi1> to vector<8x5xi1>
    %387 = arith.select %386, %384, %337 : vector<8x5xi1>, vector<8x5xf32>
    %388 = vector.extract_strided_slice %387 {offsets = [0, 0], sizes = [8, 1], strides = [1, 1]} : vector<8x5xf32> to vector<8x1xf32>
    %389 = vector.extract_strided_slice %8 {offsets = [0, 0], sizes = [1, 5], strides = [1, 1]} : vector<5x5xf32> to vector<1x5xf32>
    %390 = vector.broadcast %388 : vector<8x1xf32> to vector<8x5xf32>
    %391 = vector.broadcast %389 : vector<1x5xf32> to vector<8x5xf32>
    %392 = arith.addf %390, %391 : vector<8x5xf32>
    %c0_i32_45 = arith.constant 0 : i32
    %393 = vector.broadcast %c0_i32_45 : i32 to vector<8x5xi32>
    %394 = vector.extract_strided_slice %387 {offsets = [0, 1], sizes = [8, 1], strides = [1, 1]} : vector<8x5xf32> to vector<8x1xf32>
    %395 = vector.extract_strided_slice %8 {offsets = [1, 0], sizes = [1, 5], strides = [1, 1]} : vector<5x5xf32> to vector<1x5xf32>
    %396 = vector.broadcast %394 : vector<8x1xf32> to vector<8x5xf32>
    %397 = vector.broadcast %395 : vector<1x5xf32> to vector<8x5xf32>
    %398 = arith.addf %396, %397 : vector<8x5xf32>
    %399 = arith.cmpf ogt, %398, %392 : vector<8x5xf32>
    %400 = arith.select %399, %398, %392 : vector<8x5xi1>, vector<8x5xf32>
    %c1_i32_46 = arith.constant 1 : i32
    %401 = vector.broadcast %c1_i32_46 : i32 to vector<8x5xi32>
    %402 = arith.select %399, %401, %393 : vector<8x5xi1>, vector<8x5xi32>
    %403 = vector.extract_strided_slice %387 {offsets = [0, 2], sizes = [8, 1], strides = [1, 1]} : vector<8x5xf32> to vector<8x1xf32>
    %404 = vector.extract_strided_slice %8 {offsets = [2, 0], sizes = [1, 5], strides = [1, 1]} : vector<5x5xf32> to vector<1x5xf32>
    %405 = vector.broadcast %403 : vector<8x1xf32> to vector<8x5xf32>
    %406 = vector.broadcast %404 : vector<1x5xf32> to vector<8x5xf32>
    %407 = arith.addf %405, %406 : vector<8x5xf32>
    %408 = arith.cmpf ogt, %407, %400 : vector<8x5xf32>
    %409 = arith.select %408, %407, %400 : vector<8x5xi1>, vector<8x5xf32>
    %c2_i32_47 = arith.constant 2 : i32
    %410 = vector.broadcast %c2_i32_47 : i32 to vector<8x5xi32>
    %411 = arith.select %408, %410, %402 : vector<8x5xi1>, vector<8x5xi32>
    %412 = vector.extract_strided_slice %387 {offsets = [0, 3], sizes = [8, 1], strides = [1, 1]} : vector<8x5xf32> to vector<8x1xf32>
    %413 = vector.extract_strided_slice %8 {offsets = [3, 0], sizes = [1, 5], strides = [1, 1]} : vector<5x5xf32> to vector<1x5xf32>
    %414 = vector.broadcast %412 : vector<8x1xf32> to vector<8x5xf32>
    %415 = vector.broadcast %413 : vector<1x5xf32> to vector<8x5xf32>
    %416 = arith.addf %414, %415 : vector<8x5xf32>
    %417 = arith.cmpf ogt, %416, %409 : vector<8x5xf32>
    %418 = arith.select %417, %416, %409 : vector<8x5xi1>, vector<8x5xf32>
    %c3_i32_48 = arith.constant 3 : i32
    %419 = vector.broadcast %c3_i32_48 : i32 to vector<8x5xi32>
    %420 = arith.select %417, %419, %411 : vector<8x5xi1>, vector<8x5xi32>
    %421 = vector.extract_strided_slice %387 {offsets = [0, 4], sizes = [8, 1], strides = [1, 1]} : vector<8x5xf32> to vector<8x1xf32>
    %422 = vector.extract_strided_slice %8 {offsets = [4, 0], sizes = [1, 5], strides = [1, 1]} : vector<5x5xf32> to vector<1x5xf32>
    %423 = vector.broadcast %421 : vector<8x1xf32> to vector<8x5xf32>
    %424 = vector.broadcast %422 : vector<1x5xf32> to vector<8x5xf32>
    %425 = arith.addf %423, %424 : vector<8x5xf32>
    %426 = arith.cmpf ogt, %425, %418 : vector<8x5xf32>
    %427 = arith.select %426, %425, %418 : vector<8x5xi1>, vector<8x5xf32>
    %c4_i32_49 = arith.constant 4 : i32
    %428 = vector.broadcast %c4_i32_49 : i32 to vector<8x5xi32>
    %429 = arith.select %426, %428, %420 : vector<8x5xi1>, vector<8x5xi32>
    %430 = vector.extract_strided_slice %2 {offsets = [0, 2], sizes = [8, 1], strides = [1, 1]} : vector<8x8xi32> to vector<8x1xi32>
    %c0_i32_50 = arith.constant 0 : i32
    %431 = vector.broadcast %c0_i32_50 : i32 to vector<8x1xi32>
    %432 = arith.cmpi sgt, %430, %431 : vector<8x1xi32>
    %433 = vector.extract_strided_slice %334 {offsets = [16, 0], sizes = [8, 5], strides = [1, 1]} : vector<64x128xf32> to vector<8x5xf32>
    %434 = arith.addf %427, %433 : vector<8x5xf32>
    %435 = vector.shape_cast %432 : vector<8x1xi1> to vector<8x1xi1>
    %436 = vector.broadcast %435 : vector<8x1xi1> to vector<8x5xi1>
    %437 = arith.select %436, %434, %387 : vector<8x5xi1>, vector<8x5xf32>
    %438 = vector.extract_strided_slice %437 {offsets = [0, 0], sizes = [8, 1], strides = [1, 1]} : vector<8x5xf32> to vector<8x1xf32>
    %439 = vector.extract_strided_slice %8 {offsets = [0, 0], sizes = [1, 5], strides = [1, 1]} : vector<5x5xf32> to vector<1x5xf32>
    %440 = vector.broadcast %438 : vector<8x1xf32> to vector<8x5xf32>
    %441 = vector.broadcast %439 : vector<1x5xf32> to vector<8x5xf32>
    %442 = arith.addf %440, %441 : vector<8x5xf32>
    %c0_i32_51 = arith.constant 0 : i32
    %443 = vector.broadcast %c0_i32_51 : i32 to vector<8x5xi32>
    %444 = vector.extract_strided_slice %437 {offsets = [0, 1], sizes = [8, 1], strides = [1, 1]} : vector<8x5xf32> to vector<8x1xf32>
    %445 = vector.extract_strided_slice %8 {offsets = [1, 0], sizes = [1, 5], strides = [1, 1]} : vector<5x5xf32> to vector<1x5xf32>
    %446 = vector.broadcast %444 : vector<8x1xf32> to vector<8x5xf32>
    %447 = vector.broadcast %445 : vector<1x5xf32> to vector<8x5xf32>
    %448 = arith.addf %446, %447 : vector<8x5xf32>
    %449 = arith.cmpf ogt, %448, %442 : vector<8x5xf32>
    %450 = arith.select %449, %448, %442 : vector<8x5xi1>, vector<8x5xf32>
    %c1_i32_52 = arith.constant 1 : i32
    %451 = vector.broadcast %c1_i32_52 : i32 to vector<8x5xi32>
    %452 = arith.select %449, %451, %443 : vector<8x5xi1>, vector<8x5xi32>
    %453 = vector.extract_strided_slice %437 {offsets = [0, 2], sizes = [8, 1], strides = [1, 1]} : vector<8x5xf32> to vector<8x1xf32>
    %454 = vector.extract_strided_slice %8 {offsets = [2, 0], sizes = [1, 5], strides = [1, 1]} : vector<5x5xf32> to vector<1x5xf32>
    %455 = vector.broadcast %453 : vector<8x1xf32> to vector<8x5xf32>
    %456 = vector.broadcast %454 : vector<1x5xf32> to vector<8x5xf32>
    %457 = arith.addf %455, %456 : vector<8x5xf32>
    %458 = arith.cmpf ogt, %457, %450 : vector<8x5xf32>
    %459 = arith.select %458, %457, %450 : vector<8x5xi1>, vector<8x5xf32>
    %c2_i32_53 = arith.constant 2 : i32
    %460 = vector.broadcast %c2_i32_53 : i32 to vector<8x5xi32>
    %461 = arith.select %458, %460, %452 : vector<8x5xi1>, vector<8x5xi32>
    %462 = vector.extract_strided_slice %437 {offsets = [0, 3], sizes = [8, 1], strides = [1, 1]} : vector<8x5xf32> to vector<8x1xf32>
    %463 = vector.extract_strided_slice %8 {offsets = [3, 0], sizes = [1, 5], strides = [1, 1]} : vector<5x5xf32> to vector<1x5xf32>
    %464 = vector.broadcast %462 : vector<8x1xf32> to vector<8x5xf32>
    %465 = vector.broadcast %463 : vector<1x5xf32> to vector<8x5xf32>
    %466 = arith.addf %464, %465 : vector<8x5xf32>
    %467 = arith.cmpf ogt, %466, %459 : vector<8x5xf32>
    %468 = arith.select %467, %466, %459 : vector<8x5xi1>, vector<8x5xf32>
    %c3_i32_54 = arith.constant 3 : i32
    %469 = vector.broadcast %c3_i32_54 : i32 to vector<8x5xi32>
    %470 = arith.select %467, %469, %461 : vector<8x5xi1>, vector<8x5xi32>
    %471 = vector.extract_strided_slice %437 {offsets = [0, 4], sizes = [8, 1], strides = [1, 1]} : vector<8x5xf32> to vector<8x1xf32>
    %472 = vector.extract_strided_slice %8 {offsets = [4, 0], sizes = [1, 5], strides = [1, 1]} : vector<5x5xf32> to vector<1x5xf32>
    %473 = vector.broadcast %471 : vector<8x1xf32> to vector<8x5xf32>
    %474 = vector.broadcast %472 : vector<1x5xf32> to vector<8x5xf32>
    %475 = arith.addf %473, %474 : vector<8x5xf32>
    %476 = arith.cmpf ogt, %475, %468 : vector<8x5xf32>
    %477 = arith.select %476, %475, %468 : vector<8x5xi1>, vector<8x5xf32>
    %c4_i32_55 = arith.constant 4 : i32
    %478 = vector.broadcast %c4_i32_55 : i32 to vector<8x5xi32>
    %479 = arith.select %476, %478, %470 : vector<8x5xi1>, vector<8x5xi32>
    %480 = vector.extract_strided_slice %2 {offsets = [0, 3], sizes = [8, 1], strides = [1, 1]} : vector<8x8xi32> to vector<8x1xi32>
    %c0_i32_56 = arith.constant 0 : i32
    %481 = vector.broadcast %c0_i32_56 : i32 to vector<8x1xi32>
    %482 = arith.cmpi sgt, %480, %481 : vector<8x1xi32>
    %483 = vector.extract_strided_slice %334 {offsets = [24, 0], sizes = [8, 5], strides = [1, 1]} : vector<64x128xf32> to vector<8x5xf32>
    %484 = arith.addf %477, %483 : vector<8x5xf32>
    %485 = vector.shape_cast %482 : vector<8x1xi1> to vector<8x1xi1>
    %486 = vector.broadcast %485 : vector<8x1xi1> to vector<8x5xi1>
    %487 = arith.select %486, %484, %437 : vector<8x5xi1>, vector<8x5xf32>
    %488 = vector.extract_strided_slice %487 {offsets = [0, 0], sizes = [8, 1], strides = [1, 1]} : vector<8x5xf32> to vector<8x1xf32>
    %489 = vector.extract_strided_slice %8 {offsets = [0, 0], sizes = [1, 5], strides = [1, 1]} : vector<5x5xf32> to vector<1x5xf32>
    %490 = vector.broadcast %488 : vector<8x1xf32> to vector<8x5xf32>
    %491 = vector.broadcast %489 : vector<1x5xf32> to vector<8x5xf32>
    %492 = arith.addf %490, %491 : vector<8x5xf32>
    %c0_i32_57 = arith.constant 0 : i32
    %493 = vector.broadcast %c0_i32_57 : i32 to vector<8x5xi32>
    %494 = vector.extract_strided_slice %487 {offsets = [0, 1], sizes = [8, 1], strides = [1, 1]} : vector<8x5xf32> to vector<8x1xf32>
    %495 = vector.extract_strided_slice %8 {offsets = [1, 0], sizes = [1, 5], strides = [1, 1]} : vector<5x5xf32> to vector<1x5xf32>
    %496 = vector.broadcast %494 : vector<8x1xf32> to vector<8x5xf32>
    %497 = vector.broadcast %495 : vector<1x5xf32> to vector<8x5xf32>
    %498 = arith.addf %496, %497 : vector<8x5xf32>
    %499 = arith.cmpf ogt, %498, %492 : vector<8x5xf32>
    %500 = arith.select %499, %498, %492 : vector<8x5xi1>, vector<8x5xf32>
    %c1_i32_58 = arith.constant 1 : i32
    %501 = vector.broadcast %c1_i32_58 : i32 to vector<8x5xi32>
    %502 = arith.select %499, %501, %493 : vector<8x5xi1>, vector<8x5xi32>
    %503 = vector.extract_strided_slice %487 {offsets = [0, 2], sizes = [8, 1], strides = [1, 1]} : vector<8x5xf32> to vector<8x1xf32>
    %504 = vector.extract_strided_slice %8 {offsets = [2, 0], sizes = [1, 5], strides = [1, 1]} : vector<5x5xf32> to vector<1x5xf32>
    %505 = vector.broadcast %503 : vector<8x1xf32> to vector<8x5xf32>
    %506 = vector.broadcast %504 : vector<1x5xf32> to vector<8x5xf32>
    %507 = arith.addf %505, %506 : vector<8x5xf32>
    %508 = arith.cmpf ogt, %507, %500 : vector<8x5xf32>
    %509 = arith.select %508, %507, %500 : vector<8x5xi1>, vector<8x5xf32>
    %c2_i32_59 = arith.constant 2 : i32
    %510 = vector.broadcast %c2_i32_59 : i32 to vector<8x5xi32>
    %511 = arith.select %508, %510, %502 : vector<8x5xi1>, vector<8x5xi32>
    %512 = vector.extract_strided_slice %487 {offsets = [0, 3], sizes = [8, 1], strides = [1, 1]} : vector<8x5xf32> to vector<8x1xf32>
    %513 = vector.extract_strided_slice %8 {offsets = [3, 0], sizes = [1, 5], strides = [1, 1]} : vector<5x5xf32> to vector<1x5xf32>
    %514 = vector.broadcast %512 : vector<8x1xf32> to vector<8x5xf32>
    %515 = vector.broadcast %513 : vector<1x5xf32> to vector<8x5xf32>
    %516 = arith.addf %514, %515 : vector<8x5xf32>
    %517 = arith.cmpf ogt, %516, %509 : vector<8x5xf32>
    %518 = arith.select %517, %516, %509 : vector<8x5xi1>, vector<8x5xf32>
    %c3_i32_60 = arith.constant 3 : i32
    %519 = vector.broadcast %c3_i32_60 : i32 to vector<8x5xi32>
    %520 = arith.select %517, %519, %511 : vector<8x5xi1>, vector<8x5xi32>
    %521 = vector.extract_strided_slice %487 {offsets = [0, 4], sizes = [8, 1], strides = [1, 1]} : vector<8x5xf32> to vector<8x1xf32>
    %522 = vector.extract_strided_slice %8 {offsets = [4, 0], sizes = [1, 5], strides = [1, 1]} : vector<5x5xf32> to vector<1x5xf32>
    %523 = vector.broadcast %521 : vector<8x1xf32> to vector<8x5xf32>
    %524 = vector.broadcast %522 : vector<1x5xf32> to vector<8x5xf32>
    %525 = arith.addf %523, %524 : vector<8x5xf32>
    %526 = arith.cmpf ogt, %525, %518 : vector<8x5xf32>
    %527 = arith.select %526, %525, %518 : vector<8x5xi1>, vector<8x5xf32>
    %c4_i32_61 = arith.constant 4 : i32
    %528 = vector.broadcast %c4_i32_61 : i32 to vector<8x5xi32>
    %529 = arith.select %526, %528, %520 : vector<8x5xi1>, vector<8x5xi32>
    %530 = vector.extract_strided_slice %2 {offsets = [0, 4], sizes = [8, 1], strides = [1, 1]} : vector<8x8xi32> to vector<8x1xi32>
    %c0_i32_62 = arith.constant 0 : i32
    %531 = vector.broadcast %c0_i32_62 : i32 to vector<8x1xi32>
    %532 = arith.cmpi sgt, %530, %531 : vector<8x1xi32>
    %533 = vector.extract_strided_slice %334 {offsets = [32, 0], sizes = [8, 5], strides = [1, 1]} : vector<64x128xf32> to vector<8x5xf32>
    %534 = arith.addf %527, %533 : vector<8x5xf32>
    %535 = vector.shape_cast %532 : vector<8x1xi1> to vector<8x1xi1>
    %536 = vector.broadcast %535 : vector<8x1xi1> to vector<8x5xi1>
    %537 = arith.select %536, %534, %487 : vector<8x5xi1>, vector<8x5xf32>
    %538 = vector.extract_strided_slice %537 {offsets = [0, 0], sizes = [8, 1], strides = [1, 1]} : vector<8x5xf32> to vector<8x1xf32>
    %539 = vector.extract_strided_slice %8 {offsets = [0, 0], sizes = [1, 5], strides = [1, 1]} : vector<5x5xf32> to vector<1x5xf32>
    %540 = vector.broadcast %538 : vector<8x1xf32> to vector<8x5xf32>
    %541 = vector.broadcast %539 : vector<1x5xf32> to vector<8x5xf32>
    %542 = arith.addf %540, %541 : vector<8x5xf32>
    %c0_i32_63 = arith.constant 0 : i32
    %543 = vector.broadcast %c0_i32_63 : i32 to vector<8x5xi32>
    %544 = vector.extract_strided_slice %537 {offsets = [0, 1], sizes = [8, 1], strides = [1, 1]} : vector<8x5xf32> to vector<8x1xf32>
    %545 = vector.extract_strided_slice %8 {offsets = [1, 0], sizes = [1, 5], strides = [1, 1]} : vector<5x5xf32> to vector<1x5xf32>
    %546 = vector.broadcast %544 : vector<8x1xf32> to vector<8x5xf32>
    %547 = vector.broadcast %545 : vector<1x5xf32> to vector<8x5xf32>
    %548 = arith.addf %546, %547 : vector<8x5xf32>
    %549 = arith.cmpf ogt, %548, %542 : vector<8x5xf32>
    %550 = arith.select %549, %548, %542 : vector<8x5xi1>, vector<8x5xf32>
    %c1_i32_64 = arith.constant 1 : i32
    %551 = vector.broadcast %c1_i32_64 : i32 to vector<8x5xi32>
    %552 = arith.select %549, %551, %543 : vector<8x5xi1>, vector<8x5xi32>
    %553 = vector.extract_strided_slice %537 {offsets = [0, 2], sizes = [8, 1], strides = [1, 1]} : vector<8x5xf32> to vector<8x1xf32>
    %554 = vector.extract_strided_slice %8 {offsets = [2, 0], sizes = [1, 5], strides = [1, 1]} : vector<5x5xf32> to vector<1x5xf32>
    %555 = vector.broadcast %553 : vector<8x1xf32> to vector<8x5xf32>
    %556 = vector.broadcast %554 : vector<1x5xf32> to vector<8x5xf32>
    %557 = arith.addf %555, %556 : vector<8x5xf32>
    %558 = arith.cmpf ogt, %557, %550 : vector<8x5xf32>
    %559 = arith.select %558, %557, %550 : vector<8x5xi1>, vector<8x5xf32>
    %c2_i32_65 = arith.constant 2 : i32
    %560 = vector.broadcast %c2_i32_65 : i32 to vector<8x5xi32>
    %561 = arith.select %558, %560, %552 : vector<8x5xi1>, vector<8x5xi32>
    %562 = vector.extract_strided_slice %537 {offsets = [0, 3], sizes = [8, 1], strides = [1, 1]} : vector<8x5xf32> to vector<8x1xf32>
    %563 = vector.extract_strided_slice %8 {offsets = [3, 0], sizes = [1, 5], strides = [1, 1]} : vector<5x5xf32> to vector<1x5xf32>
    %564 = vector.broadcast %562 : vector<8x1xf32> to vector<8x5xf32>
    %565 = vector.broadcast %563 : vector<1x5xf32> to vector<8x5xf32>
    %566 = arith.addf %564, %565 : vector<8x5xf32>
    %567 = arith.cmpf ogt, %566, %559 : vector<8x5xf32>
    %568 = arith.select %567, %566, %559 : vector<8x5xi1>, vector<8x5xf32>
    %c3_i32_66 = arith.constant 3 : i32
    %569 = vector.broadcast %c3_i32_66 : i32 to vector<8x5xi32>
    %570 = arith.select %567, %569, %561 : vector<8x5xi1>, vector<8x5xi32>
    %571 = vector.extract_strided_slice %537 {offsets = [0, 4], sizes = [8, 1], strides = [1, 1]} : vector<8x5xf32> to vector<8x1xf32>
    %572 = vector.extract_strided_slice %8 {offsets = [4, 0], sizes = [1, 5], strides = [1, 1]} : vector<5x5xf32> to vector<1x5xf32>
    %573 = vector.broadcast %571 : vector<8x1xf32> to vector<8x5xf32>
    %574 = vector.broadcast %572 : vector<1x5xf32> to vector<8x5xf32>
    %575 = arith.addf %573, %574 : vector<8x5xf32>
    %576 = arith.cmpf ogt, %575, %568 : vector<8x5xf32>
    %577 = arith.select %576, %575, %568 : vector<8x5xi1>, vector<8x5xf32>
    %c4_i32_67 = arith.constant 4 : i32
    %578 = vector.broadcast %c4_i32_67 : i32 to vector<8x5xi32>
    %579 = arith.select %576, %578, %570 : vector<8x5xi1>, vector<8x5xi32>
    %580 = vector.extract_strided_slice %2 {offsets = [0, 5], sizes = [8, 1], strides = [1, 1]} : vector<8x8xi32> to vector<8x1xi32>
    %c0_i32_68 = arith.constant 0 : i32
    %581 = vector.broadcast %c0_i32_68 : i32 to vector<8x1xi32>
    %582 = arith.cmpi sgt, %580, %581 : vector<8x1xi32>
    %583 = vector.extract_strided_slice %334 {offsets = [40, 0], sizes = [8, 5], strides = [1, 1]} : vector<64x128xf32> to vector<8x5xf32>
    %584 = arith.addf %577, %583 : vector<8x5xf32>
    %585 = vector.shape_cast %582 : vector<8x1xi1> to vector<8x1xi1>
    %586 = vector.broadcast %585 : vector<8x1xi1> to vector<8x5xi1>
    %587 = arith.select %586, %584, %537 : vector<8x5xi1>, vector<8x5xf32>
    %588 = vector.extract_strided_slice %587 {offsets = [0, 0], sizes = [8, 1], strides = [1, 1]} : vector<8x5xf32> to vector<8x1xf32>
    %589 = vector.extract_strided_slice %8 {offsets = [0, 0], sizes = [1, 5], strides = [1, 1]} : vector<5x5xf32> to vector<1x5xf32>
    %590 = vector.broadcast %588 : vector<8x1xf32> to vector<8x5xf32>
    %591 = vector.broadcast %589 : vector<1x5xf32> to vector<8x5xf32>
    %592 = arith.addf %590, %591 : vector<8x5xf32>
    %c0_i32_69 = arith.constant 0 : i32
    %593 = vector.broadcast %c0_i32_69 : i32 to vector<8x5xi32>
    %594 = vector.extract_strided_slice %587 {offsets = [0, 1], sizes = [8, 1], strides = [1, 1]} : vector<8x5xf32> to vector<8x1xf32>
    %595 = vector.extract_strided_slice %8 {offsets = [1, 0], sizes = [1, 5], strides = [1, 1]} : vector<5x5xf32> to vector<1x5xf32>
    %596 = vector.broadcast %594 : vector<8x1xf32> to vector<8x5xf32>
    %597 = vector.broadcast %595 : vector<1x5xf32> to vector<8x5xf32>
    %598 = arith.addf %596, %597 : vector<8x5xf32>
    %599 = arith.cmpf ogt, %598, %592 : vector<8x5xf32>
    %600 = arith.select %599, %598, %592 : vector<8x5xi1>, vector<8x5xf32>
    %c1_i32_70 = arith.constant 1 : i32
    %601 = vector.broadcast %c1_i32_70 : i32 to vector<8x5xi32>
    %602 = arith.select %599, %601, %593 : vector<8x5xi1>, vector<8x5xi32>
    %603 = vector.extract_strided_slice %587 {offsets = [0, 2], sizes = [8, 1], strides = [1, 1]} : vector<8x5xf32> to vector<8x1xf32>
    %604 = vector.extract_strided_slice %8 {offsets = [2, 0], sizes = [1, 5], strides = [1, 1]} : vector<5x5xf32> to vector<1x5xf32>
    %605 = vector.broadcast %603 : vector<8x1xf32> to vector<8x5xf32>
    %606 = vector.broadcast %604 : vector<1x5xf32> to vector<8x5xf32>
    %607 = arith.addf %605, %606 : vector<8x5xf32>
    %608 = arith.cmpf ogt, %607, %600 : vector<8x5xf32>
    %609 = arith.select %608, %607, %600 : vector<8x5xi1>, vector<8x5xf32>
    %c2_i32_71 = arith.constant 2 : i32
    %610 = vector.broadcast %c2_i32_71 : i32 to vector<8x5xi32>
    %611 = arith.select %608, %610, %602 : vector<8x5xi1>, vector<8x5xi32>
    %612 = vector.extract_strided_slice %587 {offsets = [0, 3], sizes = [8, 1], strides = [1, 1]} : vector<8x5xf32> to vector<8x1xf32>
    %613 = vector.extract_strided_slice %8 {offsets = [3, 0], sizes = [1, 5], strides = [1, 1]} : vector<5x5xf32> to vector<1x5xf32>
    %614 = vector.broadcast %612 : vector<8x1xf32> to vector<8x5xf32>
    %615 = vector.broadcast %613 : vector<1x5xf32> to vector<8x5xf32>
    %616 = arith.addf %614, %615 : vector<8x5xf32>
    %617 = arith.cmpf ogt, %616, %609 : vector<8x5xf32>
    %618 = arith.select %617, %616, %609 : vector<8x5xi1>, vector<8x5xf32>
    %c3_i32_72 = arith.constant 3 : i32
    %619 = vector.broadcast %c3_i32_72 : i32 to vector<8x5xi32>
    %620 = arith.select %617, %619, %611 : vector<8x5xi1>, vector<8x5xi32>
    %621 = vector.extract_strided_slice %587 {offsets = [0, 4], sizes = [8, 1], strides = [1, 1]} : vector<8x5xf32> to vector<8x1xf32>
    %622 = vector.extract_strided_slice %8 {offsets = [4, 0], sizes = [1, 5], strides = [1, 1]} : vector<5x5xf32> to vector<1x5xf32>
    %623 = vector.broadcast %621 : vector<8x1xf32> to vector<8x5xf32>
    %624 = vector.broadcast %622 : vector<1x5xf32> to vector<8x5xf32>
    %625 = arith.addf %623, %624 : vector<8x5xf32>
    %626 = arith.cmpf ogt, %625, %618 : vector<8x5xf32>
    %627 = arith.select %626, %625, %618 : vector<8x5xi1>, vector<8x5xf32>
    %c4_i32_73 = arith.constant 4 : i32
    %628 = vector.broadcast %c4_i32_73 : i32 to vector<8x5xi32>
    %629 = arith.select %626, %628, %620 : vector<8x5xi1>, vector<8x5xi32>
    %630 = vector.extract_strided_slice %2 {offsets = [0, 6], sizes = [8, 1], strides = [1, 1]} : vector<8x8xi32> to vector<8x1xi32>
    %c0_i32_74 = arith.constant 0 : i32
    %631 = vector.broadcast %c0_i32_74 : i32 to vector<8x1xi32>
    %632 = arith.cmpi sgt, %630, %631 : vector<8x1xi32>
    %633 = vector.extract_strided_slice %334 {offsets = [48, 0], sizes = [8, 5], strides = [1, 1]} : vector<64x128xf32> to vector<8x5xf32>
    %634 = arith.addf %627, %633 : vector<8x5xf32>
    %635 = vector.shape_cast %632 : vector<8x1xi1> to vector<8x1xi1>
    %636 = vector.broadcast %635 : vector<8x1xi1> to vector<8x5xi1>
    %637 = arith.select %636, %634, %587 : vector<8x5xi1>, vector<8x5xf32>
    %638 = vector.extract_strided_slice %637 {offsets = [0, 0], sizes = [8, 1], strides = [1, 1]} : vector<8x5xf32> to vector<8x1xf32>
    %639 = vector.extract_strided_slice %8 {offsets = [0, 0], sizes = [1, 5], strides = [1, 1]} : vector<5x5xf32> to vector<1x5xf32>
    %640 = vector.broadcast %638 : vector<8x1xf32> to vector<8x5xf32>
    %641 = vector.broadcast %639 : vector<1x5xf32> to vector<8x5xf32>
    %642 = arith.addf %640, %641 : vector<8x5xf32>
    %c0_i32_75 = arith.constant 0 : i32
    %643 = vector.broadcast %c0_i32_75 : i32 to vector<8x5xi32>
    %644 = vector.extract_strided_slice %637 {offsets = [0, 1], sizes = [8, 1], strides = [1, 1]} : vector<8x5xf32> to vector<8x1xf32>
    %645 = vector.extract_strided_slice %8 {offsets = [1, 0], sizes = [1, 5], strides = [1, 1]} : vector<5x5xf32> to vector<1x5xf32>
    %646 = vector.broadcast %644 : vector<8x1xf32> to vector<8x5xf32>
    %647 = vector.broadcast %645 : vector<1x5xf32> to vector<8x5xf32>
    %648 = arith.addf %646, %647 : vector<8x5xf32>
    %649 = arith.cmpf ogt, %648, %642 : vector<8x5xf32>
    %650 = arith.select %649, %648, %642 : vector<8x5xi1>, vector<8x5xf32>
    %c1_i32_76 = arith.constant 1 : i32
    %651 = vector.broadcast %c1_i32_76 : i32 to vector<8x5xi32>
    %652 = arith.select %649, %651, %643 : vector<8x5xi1>, vector<8x5xi32>
    %653 = vector.extract_strided_slice %637 {offsets = [0, 2], sizes = [8, 1], strides = [1, 1]} : vector<8x5xf32> to vector<8x1xf32>
    %654 = vector.extract_strided_slice %8 {offsets = [2, 0], sizes = [1, 5], strides = [1, 1]} : vector<5x5xf32> to vector<1x5xf32>
    %655 = vector.broadcast %653 : vector<8x1xf32> to vector<8x5xf32>
    %656 = vector.broadcast %654 : vector<1x5xf32> to vector<8x5xf32>
    %657 = arith.addf %655, %656 : vector<8x5xf32>
    %658 = arith.cmpf ogt, %657, %650 : vector<8x5xf32>
    %659 = arith.select %658, %657, %650 : vector<8x5xi1>, vector<8x5xf32>
    %c2_i32_77 = arith.constant 2 : i32
    %660 = vector.broadcast %c2_i32_77 : i32 to vector<8x5xi32>
    %661 = arith.select %658, %660, %652 : vector<8x5xi1>, vector<8x5xi32>
    %662 = vector.extract_strided_slice %637 {offsets = [0, 3], sizes = [8, 1], strides = [1, 1]} : vector<8x5xf32> to vector<8x1xf32>
    %663 = vector.extract_strided_slice %8 {offsets = [3, 0], sizes = [1, 5], strides = [1, 1]} : vector<5x5xf32> to vector<1x5xf32>
    %664 = vector.broadcast %662 : vector<8x1xf32> to vector<8x5xf32>
    %665 = vector.broadcast %663 : vector<1x5xf32> to vector<8x5xf32>
    %666 = arith.addf %664, %665 : vector<8x5xf32>
    %667 = arith.cmpf ogt, %666, %659 : vector<8x5xf32>
    %668 = arith.select %667, %666, %659 : vector<8x5xi1>, vector<8x5xf32>
    %c3_i32_78 = arith.constant 3 : i32
    %669 = vector.broadcast %c3_i32_78 : i32 to vector<8x5xi32>
    %670 = arith.select %667, %669, %661 : vector<8x5xi1>, vector<8x5xi32>
    %671 = vector.extract_strided_slice %637 {offsets = [0, 4], sizes = [8, 1], strides = [1, 1]} : vector<8x5xf32> to vector<8x1xf32>
    %672 = vector.extract_strided_slice %8 {offsets = [4, 0], sizes = [1, 5], strides = [1, 1]} : vector<5x5xf32> to vector<1x5xf32>
    %673 = vector.broadcast %671 : vector<8x1xf32> to vector<8x5xf32>
    %674 = vector.broadcast %672 : vector<1x5xf32> to vector<8x5xf32>
    %675 = arith.addf %673, %674 : vector<8x5xf32>
    %676 = arith.cmpf ogt, %675, %668 : vector<8x5xf32>
    %677 = arith.select %676, %675, %668 : vector<8x5xi1>, vector<8x5xf32>
    %c4_i32_79 = arith.constant 4 : i32
    %678 = vector.broadcast %c4_i32_79 : i32 to vector<8x5xi32>
    %679 = arith.select %676, %678, %670 : vector<8x5xi1>, vector<8x5xi32>
    %680 = vector.extract_strided_slice %2 {offsets = [0, 7], sizes = [8, 1], strides = [1, 1]} : vector<8x8xi32> to vector<8x1xi32>
    %c0_i32_80 = arith.constant 0 : i32
    %681 = vector.broadcast %c0_i32_80 : i32 to vector<8x1xi32>
    %682 = arith.cmpi sgt, %680, %681 : vector<8x1xi32>
    %683 = vector.extract_strided_slice %334 {offsets = [56, 0], sizes = [8, 5], strides = [1, 1]} : vector<64x128xf32> to vector<8x5xf32>
    %684 = arith.addf %677, %683 : vector<8x5xf32>
    %685 = vector.shape_cast %682 : vector<8x1xi1> to vector<8x1xi1>
    %686 = vector.broadcast %685 : vector<8x1xi1> to vector<8x5xi1>
    %687 = arith.select %686, %684, %637 : vector<8x5xi1>, vector<8x5xf32>
    %688 = vector.broadcast %7 : vector<1x5xf32> to vector<8x5xf32>
    %689 = arith.addf %687, %688 : vector<8x5xf32>
    %690 = tpu.iota {dimensions = array<i32: 1>} : vector<8x5xi32>
    %cst_81 = arith.constant dense<0xFF800000> : vector<8xf32>
    %691 = vector.multi_reduction <maximumf>, %689, %cst_81 [1] : vector<8x5xf32> to vector<8xf32>
    %692 = vector.shape_cast %691 : vector<8xf32> to vector<8x1xf32>
    %693 = vector.broadcast %692 : vector<8x1xf32> to vector<8x5xf32>
    %694 = arith.cmpf oeq, %689, %693 : vector<8x5xf32>
    %c5_i32 = arith.constant 5 : i32
    %695 = vector.broadcast %c5_i32 : i32 to vector<8x5xi32>
    %696 = arith.select %694, %690, %695 : vector<8x5xi1>, vector<8x5xi32>
    %cst_82 = arith.constant dense<2147483647> : vector<8xi32>
    %697 = vector.multi_reduction <minsi>, %696, %cst_82 [1] : vector<8x5xi32> to vector<8xi32>
    %698 = vector.shape_cast %697 : vector<8xi32> to vector<8x1xi32>
    %699 = vector.broadcast %698 : vector<8x1xi32> to vector<8x5xi32>
    %700 = arith.cmpi eq, %690, %699 : vector<8x5xi32>
    %701 = arith.extui %700 : vector<8x5xi1> to vector<8x5xi32>
    %702 = arith.muli %679, %701 : vector<8x5xi32>
    %cst_83 = arith.constant dense<0> : vector<8xi32>
    %703 = vector.multi_reduction <add>, %702, %cst_83 [1] : vector<8x5xi32> to vector<8xi32>
    %704 = vector.shape_cast %703 : vector<8xi32> to vector<8x1xi32>
    %705 = vector.extract_strided_slice %2 {offsets = [0, 7], sizes = [8, 1], strides = [1, 1]} : vector<8x8xi32> to vector<8x1xi32>
    %c0_i32_84 = arith.constant 0 : i32
    %706 = vector.broadcast %c0_i32_84 : i32 to vector<8x1xi32>
    %707 = arith.cmpi sgt, %705, %706 : vector<8x1xi32>
    %708 = arith.select %707, %704, %698 : vector<8x1xi1>, vector<8x1xi32>
    %709 = vector.broadcast %708 : vector<8x1xi32> to vector<8x5xi32>
    %710 = arith.cmpi eq, %690, %709 : vector<8x5xi32>
    %711 = arith.extui %710 : vector<8x5xi1> to vector<8x5xi32>
    %712 = arith.muli %629, %711 : vector<8x5xi32>
    %cst_85 = arith.constant dense<0> : vector<8xi32>
    %713 = vector.multi_reduction <add>, %712, %cst_85 [1] : vector<8x5xi32> to vector<8xi32>
    %714 = vector.shape_cast %713 : vector<8xi32> to vector<8x1xi32>
    %715 = vector.extract_strided_slice %2 {offsets = [0, 6], sizes = [8, 1], strides = [1, 1]} : vector<8x8xi32> to vector<8x1xi32>
    %c0_i32_86 = arith.constant 0 : i32
    %716 = vector.broadcast %c0_i32_86 : i32 to vector<8x1xi32>
    %717 = arith.cmpi sgt, %715, %716 : vector<8x1xi32>
    %718 = arith.select %717, %714, %708 : vector<8x1xi1>, vector<8x1xi32>
    %719 = vector.broadcast %718 : vector<8x1xi32> to vector<8x5xi32>
    %720 = arith.cmpi eq, %690, %719 : vector<8x5xi32>
    %721 = arith.extui %720 : vector<8x5xi1> to vector<8x5xi32>
    %722 = arith.muli %579, %721 : vector<8x5xi32>
    %cst_87 = arith.constant dense<0> : vector<8xi32>
    %723 = vector.multi_reduction <add>, %722, %cst_87 [1] : vector<8x5xi32> to vector<8xi32>
    %724 = vector.shape_cast %723 : vector<8xi32> to vector<8x1xi32>
    %725 = vector.extract_strided_slice %2 {offsets = [0, 5], sizes = [8, 1], strides = [1, 1]} : vector<8x8xi32> to vector<8x1xi32>
    %c0_i32_88 = arith.constant 0 : i32
    %726 = vector.broadcast %c0_i32_88 : i32 to vector<8x1xi32>
    %727 = arith.cmpi sgt, %725, %726 : vector<8x1xi32>
    %728 = arith.select %727, %724, %718 : vector<8x1xi1>, vector<8x1xi32>
    %729 = vector.broadcast %728 : vector<8x1xi32> to vector<8x5xi32>
    %730 = arith.cmpi eq, %690, %729 : vector<8x5xi32>
    %731 = arith.extui %730 : vector<8x5xi1> to vector<8x5xi32>
    %732 = arith.muli %529, %731 : vector<8x5xi32>
    %cst_89 = arith.constant dense<0> : vector<8xi32>
    %733 = vector.multi_reduction <add>, %732, %cst_89 [1] : vector<8x5xi32> to vector<8xi32>
    %734 = vector.shape_cast %733 : vector<8xi32> to vector<8x1xi32>
    %735 = vector.extract_strided_slice %2 {offsets = [0, 4], sizes = [8, 1], strides = [1, 1]} : vector<8x8xi32> to vector<8x1xi32>
    %c0_i32_90 = arith.constant 0 : i32
    %736 = vector.broadcast %c0_i32_90 : i32 to vector<8x1xi32>
    %737 = arith.cmpi sgt, %735, %736 : vector<8x1xi32>
    %738 = arith.select %737, %734, %728 : vector<8x1xi1>, vector<8x1xi32>
    %739 = vector.broadcast %738 : vector<8x1xi32> to vector<8x5xi32>
    %740 = arith.cmpi eq, %690, %739 : vector<8x5xi32>
    %741 = arith.extui %740 : vector<8x5xi1> to vector<8x5xi32>
    %742 = arith.muli %479, %741 : vector<8x5xi32>
    %cst_91 = arith.constant dense<0> : vector<8xi32>
    %743 = vector.multi_reduction <add>, %742, %cst_91 [1] : vector<8x5xi32> to vector<8xi32>
    %744 = vector.shape_cast %743 : vector<8xi32> to vector<8x1xi32>
    %745 = vector.extract_strided_slice %2 {offsets = [0, 3], sizes = [8, 1], strides = [1, 1]} : vector<8x8xi32> to vector<8x1xi32>
    %c0_i32_92 = arith.constant 0 : i32
    %746 = vector.broadcast %c0_i32_92 : i32 to vector<8x1xi32>
    %747 = arith.cmpi sgt, %745, %746 : vector<8x1xi32>
    %748 = arith.select %747, %744, %738 : vector<8x1xi1>, vector<8x1xi32>
    %749 = vector.broadcast %748 : vector<8x1xi32> to vector<8x5xi32>
    %750 = arith.cmpi eq, %690, %749 : vector<8x5xi32>
    %751 = arith.extui %750 : vector<8x5xi1> to vector<8x5xi32>
    %752 = arith.muli %429, %751 : vector<8x5xi32>
    %cst_93 = arith.constant dense<0> : vector<8xi32>
    %753 = vector.multi_reduction <add>, %752, %cst_93 [1] : vector<8x5xi32> to vector<8xi32>
    %754 = vector.shape_cast %753 : vector<8xi32> to vector<8x1xi32>
    %755 = vector.extract_strided_slice %2 {offsets = [0, 2], sizes = [8, 1], strides = [1, 1]} : vector<8x8xi32> to vector<8x1xi32>
    %c0_i32_94 = arith.constant 0 : i32
    %756 = vector.broadcast %c0_i32_94 : i32 to vector<8x1xi32>
    %757 = arith.cmpi sgt, %755, %756 : vector<8x1xi32>
    %758 = arith.select %757, %754, %748 : vector<8x1xi1>, vector<8x1xi32>
    %759 = vector.broadcast %758 : vector<8x1xi32> to vector<8x5xi32>
    %760 = arith.cmpi eq, %690, %759 : vector<8x5xi32>
    %761 = arith.extui %760 : vector<8x5xi1> to vector<8x5xi32>
    %762 = arith.muli %379, %761 : vector<8x5xi32>
    %cst_95 = arith.constant dense<0> : vector<8xi32>
    %763 = vector.multi_reduction <add>, %762, %cst_95 [1] : vector<8x5xi32> to vector<8xi32>
    %764 = vector.shape_cast %763 : vector<8xi32> to vector<8x1xi32>
    %765 = vector.extract_strided_slice %2 {offsets = [0, 1], sizes = [8, 1], strides = [1, 1]} : vector<8x8xi32> to vector<8x1xi32>
    %c0_i32_96 = arith.constant 0 : i32
    %766 = vector.broadcast %c0_i32_96 : i32 to vector<8x1xi32>
    %767 = arith.cmpi sgt, %765, %766 : vector<8x1xi32>
    %768 = arith.select %767, %764, %758 : vector<8x1xi1>, vector<8x1xi32>
    %769 = vector.extract_strided_slice %2 {offsets = [0, 0], sizes = [8, 1], strides = [1, 1]} : vector<8x8xi32> to vector<8x1xi32>
    %c0_i32_97 = arith.constant 0 : i32
    %770 = vector.broadcast %c0_i32_97 : i32 to vector<8x1xi32>
    %771 = arith.cmpi sgt, %769, %770 : vector<8x1xi32>
    %c0_i32_98 = arith.constant 0 : i32
    %772 = vector.broadcast %c0_i32_98 : i32 to vector<8x1xi32>
    %773 = arith.select %771, %768, %772 : vector<8x1xi1>, vector<8x1xi32>
    %774 = vector.extract_strided_slice %2 {offsets = [0, 1], sizes = [8, 1], strides = [1, 1]} : vector<8x8xi32> to vector<8x1xi32>
    %c0_i32_99 = arith.constant 0 : i32
    %775 = vector.broadcast %c0_i32_99 : i32 to vector<8x1xi32>
    %776 = arith.cmpi sgt, %774, %775 : vector<8x1xi32>
    %c0_i32_100 = arith.constant 0 : i32
    %777 = vector.broadcast %c0_i32_100 : i32 to vector<8x1xi32>
    %778 = arith.select %776, %758, %777 : vector<8x1xi1>, vector<8x1xi32>
    %779 = vector.extract_strided_slice %2 {offsets = [0, 2], sizes = [8, 1], strides = [1, 1]} : vector<8x8xi32> to vector<8x1xi32>
    %c0_i32_101 = arith.constant 0 : i32
    %780 = vector.broadcast %c0_i32_101 : i32 to vector<8x1xi32>
    %781 = arith.cmpi sgt, %779, %780 : vector<8x1xi32>
    %c0_i32_102 = arith.constant 0 : i32
    %782 = vector.broadcast %c0_i32_102 : i32 to vector<8x1xi32>
    %783 = arith.select %781, %748, %782 : vector<8x1xi1>, vector<8x1xi32>
    %784 = vector.extract_strided_slice %2 {offsets = [0, 3], sizes = [8, 1], strides = [1, 1]} : vector<8x8xi32> to vector<8x1xi32>
    %c0_i32_103 = arith.constant 0 : i32
    %785 = vector.broadcast %c0_i32_103 : i32 to vector<8x1xi32>
    %786 = arith.cmpi sgt, %784, %785 : vector<8x1xi32>
    %c0_i32_104 = arith.constant 0 : i32
    %787 = vector.broadcast %c0_i32_104 : i32 to vector<8x1xi32>
    %788 = arith.select %786, %738, %787 : vector<8x1xi1>, vector<8x1xi32>
    %789 = vector.extract_strided_slice %2 {offsets = [0, 4], sizes = [8, 1], strides = [1, 1]} : vector<8x8xi32> to vector<8x1xi32>
    %c0_i32_105 = arith.constant 0 : i32
    %790 = vector.broadcast %c0_i32_105 : i32 to vector<8x1xi32>
    %791 = arith.cmpi sgt, %789, %790 : vector<8x1xi32>
    %c0_i32_106 = arith.constant 0 : i32
    %792 = vector.broadcast %c0_i32_106 : i32 to vector<8x1xi32>
    %793 = arith.select %791, %728, %792 : vector<8x1xi1>, vector<8x1xi32>
    %794 = vector.extract_strided_slice %2 {offsets = [0, 5], sizes = [8, 1], strides = [1, 1]} : vector<8x8xi32> to vector<8x1xi32>
    %c0_i32_107 = arith.constant 0 : i32
    %795 = vector.broadcast %c0_i32_107 : i32 to vector<8x1xi32>
    %796 = arith.cmpi sgt, %794, %795 : vector<8x1xi32>
    %c0_i32_108 = arith.constant 0 : i32
    %797 = vector.broadcast %c0_i32_108 : i32 to vector<8x1xi32>
    %798 = arith.select %796, %718, %797 : vector<8x1xi1>, vector<8x1xi32>
    %799 = vector.extract_strided_slice %2 {offsets = [0, 6], sizes = [8, 1], strides = [1, 1]} : vector<8x8xi32> to vector<8x1xi32>
    %c0_i32_109 = arith.constant 0 : i32
    %800 = vector.broadcast %c0_i32_109 : i32 to vector<8x1xi32>
    %801 = arith.cmpi sgt, %799, %800 : vector<8x1xi32>
    %c0_i32_110 = arith.constant 0 : i32
    %802 = vector.broadcast %c0_i32_110 : i32 to vector<8x1xi32>
    %803 = arith.select %801, %708, %802 : vector<8x1xi1>, vector<8x1xi32>
    %804 = vector.extract_strided_slice %2 {offsets = [0, 7], sizes = [8, 1], strides = [1, 1]} : vector<8x8xi32> to vector<8x1xi32>
    %c0_i32_111 = arith.constant 0 : i32
    %805 = vector.broadcast %c0_i32_111 : i32 to vector<8x1xi32>
    %806 = arith.cmpi sgt, %804, %805 : vector<8x1xi32>
    %c0_i32_112 = arith.constant 0 : i32
    %807 = vector.broadcast %c0_i32_112 : i32 to vector<8x1xi32>
    %808 = arith.select %806, %698, %807 : vector<8x1xi1>, vector<8x1xi32>
    %809 = tpu.concatenate %773, %778, %783, %788, %793, %798, %803, %808 in 1 : vector<8x1xi32>, vector<8x1xi32>, vector<8x1xi32>, vector<8x1xi32>, vector<8x1xi32>, vector<8x1xi32>, vector<8x1xi32>, vector<8x1xi32> -> vector<8x8xi32>
    %c0_113 = arith.constant 0 : index
    %c0_114 = arith.constant 0 : index
    %810 = vector.load %arg3[%c0_113, %c0_114] : memref<8x8xi32, #tpu.memory_space<vmem>>, vector<8x8xi32>
    tpu.vector_store %arg3[%c0_113, %c0_114], %809 {strides = array<i32>} : memref<8x8xi32, #tpu.memory_space<vmem>>, vector<8x8xi32>,
    return
  }
}

</mosaic_0001>

<llo_original>
// kernel: bilstm_crf_forward.1
$region0: #{bilstm_crf_forward.1}
  #allocation0 [shape = 'u32[]', space=smem, size = 0x4, offset = 0x4, fixed_abs, tag = 'smem constant byte address 0x4 - core index']
  #allocation1 [shape = 'u32[72,128]{1,0:T(1,128)}', space=vmem, size = 0x9000, scoped, tag = 'internal scratch']
  %s0 = inlined_call_operand.vmem [shape: s32[8,16], index: 0, kind: input, shape index: {}]
  %s1 = inlined_call_operand.hbm [shape: bf16[192,128], index: 1, kind: input, shape index: {}]
  %s2 = inlined_call_operand.vmem [shape: f32[16,128], index: 2, kind: input, shape index: {}]
  %s3 = inlined_call_operand.vmem [shape: s32[8,8], index: 3, kind: output, shape index: {}]
  %s4 = sld [smem:[#allocation0]]
  $region26: #{bilstm_crf_forward.1} parent=0
    _
  %s6 = ssub.s32 1, %s4
  %s7 = scalar_select 0, %s6, %s4
  $region1: #{bilstm_crf_forward.1} parent=0
    #allocation2 [shape = 'u8[49152]{0}', space=vmem, size = 0xc000, scoped, tag = 'input window, operand 1, single buffered']
    #allocation3 [shape = 's32[1]{0}', space=sflag, size = 0x4, scoped, tag = 'scoped memory for bilstm_crf_forward.1']
    %8 = vsyncpa [#allocation3], 0
    // Predicated region
    $region2: #{bilstm_crf_forward.1} parent=1 // pred_check
      _
    $region3: #{bilstm_crf_forward.1} parent=1 // pred_check_branch
      %10 = sbr.rel (0) target = $region5
    $region4: #{bilstm_crf_forward.1} parent=1 // pred_region
      _
    $region5: #{bilstm_crf_forward.1} parent=1 // pred_fallthru
      _
    // Predicated region
    $region6: #{bilstm_crf_forward.1} parent=1 // pred_check
      _
    $region7: #{bilstm_crf_forward.1} parent=1 // pred_check_branch
      %12 = sbr.rel (0) target = $region9
    $region8: #{bilstm_crf_forward.1} parent=1 // pred_region
      %14 = vsyncadd [#allocation3], 0
      %s15 = sshll.u32 %s1, 4
      %s16 = int_to_ptr.hbm [resolvable:$true] %s15
      %s17 = sshll.u32 [#allocation2], 4
      %s18 = int_to_ptr.vmem [resolvable:$true] %s17
      %23 = dma.hbm_to_vmem [thread:$0]  %s16, 1536, %s18, [#allocation3], 64, 64, 4
    $region9: #{bilstm_crf_forward.1} parent=1 // pred_fallthru
      _
    // Predicated region
    $region10: #{bilstm_crf_forward.1} parent=1 // pred_check
      _
    $region11: #{bilstm_crf_forward.1} parent=1 // pred_check_branch
      %25 = sbr.rel (0) target = $region13
    $region12: #{bilstm_crf_forward.1} parent=1 // pred_region
      _
    $region13: #{bilstm_crf_forward.1} parent=1 // pred_fallthru
      _
    // Predicated region
    $region14: #{bilstm_crf_forward.1} parent=1 // pred_check
      _
    $region15: #{bilstm_crf_forward.1} parent=1 // pred_check_branch
      %27 = sbr.rel (0) target = $region17
    $region16: #{bilstm_crf_forward.1} parent=1 // pred_region
      %29 = dma.done [#allocation3], 1536
    $region17: #{bilstm_crf_forward.1} parent=1 // pred_fallthru
      _
    %v31 = vld [vmem:[%s0] sm:$0xff]
    %v32 = vld [vmem:[%s2] sm:$0xff]
    %v33 = vld [vmem:[%s2 + $0x8] sm:$0xff]
    %v34 = vlaneseq
    %v35 = vand.u32 %v34, 127
    %36 = vset.pattern.permute.xlu0 0
    %37 = vperm.xlu0 %36, %v31
    %v38 = vpop.permute.xlu0 %37
    %vm39 = vcmp.eq.s32.totalorder %v38, %v35
    %v40 = vsel %vm39, 1, 0
    %v41 = vcvt.s32.f32 %v40
    %42 = vset.pattern.permute.xlu0 1
    %43 = vperm.xlu0 %42, %v31
    %v44 = vpop.permute.xlu0 %43
    %vm45 = vcmp.eq.s32.totalorder %v44, %v35
    %v46 = vsel %vm45, 1, 0
    %v47 = vcvt.s32.f32 %v46
    %48 = vset.pattern.permute.xlu0 2
    %49 = vperm.xlu0 %48, %v31
    %v50 = vpop.permute.xlu0 %49
    %vm51 = vcmp.eq.s32.totalorder %v50, %v35
    %v52 = vsel %vm51, 1, 0
    %v53 = vcvt.s32.f32 %v52
    %54 = vset.pattern.permute.xlu0 3
    %55 = vperm.xlu0 %54, %v31
    %v56 = vpop.permute.xlu0 %55
    %vm57 = vcmp.eq.s32.totalorder %v56, %v35
    %v58 = vsel %vm57, 1, 0
    %v59 = vcvt.s32.f32 %v58
    %60 = vset.pattern.permute.xlu0 4
    %61 = vperm.xlu0 %60, %v31
    %v62 = vpop.permute.xlu0 %61
    %vm63 = vcmp.eq.s32.totalorder %v62, %v35
    %v64 = vsel %vm63, 1, 0
    %v65 = vcvt.s32.f32 %v64
    %66 = vset.pattern.permute.xlu0 5
    %67 = vperm.xlu0 %66, %v31
    %v68 = vpop.permute.xlu0 %67
    %vm69 = vcmp.eq.s32.totalorder %v68, %v35
    %v70 = vsel %vm69, 1, 0
    %v71 = vcvt.s32.f32 %v70
    %72 = vset.pattern.permute.xlu0 6
    %73 = vperm.xlu0 %72, %v31
    %v74 = vpop.permute.xlu0 %73
    %vm75 = vcmp.eq.s32.totalorder %v74, %v35
    %v76 = vsel %vm75, 1, 0
    %v77 = vcvt.s32.f32 %v76
    %78 = vset.pattern.permute.xlu0 7
    %79 = vperm.xlu0 %78, %v31
    %v80 = vpop.permute.xlu0 %79
    %vm81 = vcmp.eq.s32.totalorder %v80, %v35
    %v82 = vsel %vm81, 1, 0
    %v83 = vcvt.s32.f32 %v82
    %v84 = vpack.c.bf16 %v47, %v41
    %v85 = vpack.c.bf16 %v59, %v53
    %v86 = vpack.c.bf16 %v71, %v65
    %v87 = vpack.c.bf16 %v83, %v77
    %v88 = vpack.c.bf16 %v77, %v83
    %v89 = vpack.c.bf16 %v65, %v71
    %v90 = vpack.c.bf16 %v53, %v59
    %v91 = vpack.c.bf16 %v41, %v47
    %v92 = vld [vmem:[#allocation2] sm:$0xf]
    %v93 = vld [vmem:[#allocation2 + $0x4] sm:$0xf]
    %v94 = vld [vmem:[#allocation2 + $0x8] sm:$0xf]
    %v95 = vld [vmem:[#allocation2 + $0xc] sm:$0xf]
    %v96 = vld [vmem:[#allocation2 + $0x10] sm:$0xf]
    %v97 = vld [vmem:[#allocation2 + $0x14] sm:$0xf]
    %v98 = vld [vmem:[#allocation2 + $0x18] sm:$0xf]
    %v99 = vld [vmem:[#allocation2 + $0x1c] sm:$0xf]
    %v100 = vld [vmem:[#allocation2 + $0x20] sm:$0xf]
    %v101 = vld [vmem:[#allocation2 + $0x24] sm:$0xf]
    %v102 = vld [vmem:[#allocation2 + $0x28] sm:$0xf]
    %v103 = vld [vmem:[#allocation2 + $0x2c] sm:$0xf]
    %v104 = vld [vmem:[#allocation2 + $0x30] sm:$0xf]
    %v105 = vld [vmem:[#allocation2 + $0x34] sm:$0xf]
    %v106 = vld [vmem:[#allocation2 + $0x38] sm:$0xf]
    %v107 = vld [vmem:[#allocation2 + $0x3c] sm:$0xf]
    %v116 = vunpack.c.l.b16 %v100
    %v117 = vunpack.c.l.b16 %v101
    %v118 = vunpack.c.l.b16 %v102
    %v119 = vunpack.c.l.b16 %v103
    %v120 = vunpack.c.l.b16 %v104
    %v121 = vunpack.c.l.b16 %v105
    %v122 = vunpack.c.l.b16 %v106
    %v123 = vunpack.c.l.b16 %v107
    %v124 = vpack.c.b16 %v117, %v116
    %v125 = vpack.c.b16 %v119, %v118
    %v126 = vpack.c.b16 %v121, %v120
    %v127 = vpack.c.b16 %v123, %v122
    %vm132 = vcmask 523264
    %v134 = vsel %vm132, %v88, 0
    %v137 = vsel %vm132, %v89, 0
    %v140 = vsel %vm132, %v90, 0
    %v143 = vsel %vm132, %v91, 0
    %145 = vmatpush.bf16.msra.mxu0 0
    %146 = vmatpush.bf16.msra.mxu0 0
    %147 = vmatpush.bf16.msra.mxu0 0
    %148 = vmatpush.bf16.msra.mxu0 0
    %149 = vmatpush.bf16.msra.mxu0 %v127
    %150 = vmatpush.bf16.msra.mxu0 %v126
    %151 = vmatpush.bf16.msra.mxu0 %v125
    %152 = vmatpush.bf16.msra.mxu0 %v124
    %153 = vmatmul.bf16.gmra.mxu0 %v134
    %v154 = vpop.f32.mrf.mxu0
    %v155 = vadd.f32 0.0, %v154
    %v156 = vpop.f32.mrf.mxu0
    %v157 = vadd.f32 0.0, %v156
    %158 = vmatmul.bf16.gmra.mxu0 %v137
    %v159 = vpop.f32.mrf.mxu0
    %v160 = vadd.f32 0.0, %v159
    %v161 = vpop.f32.mrf.mxu0
    %v162 = vadd.f32 0.0, %v161
    %163 = vmatmul.bf16.gmra.mxu0 %v140
    %v164 = vpop.f32.mrf.mxu0
    %v165 = vadd.f32 0.0, %v164
    %v166 = vpop.f32.mrf.mxu0
    %v167 = vadd.f32 0.0, %v166
    %168 = vmatmul.bf16.gmra.mxu0 %v143
    %v169 = vpop.f32.mrf.mxu0
    %v170 = vadd.f32 0.0, %v169
    %v171 = vpop.f32.mrf.mxu0
    %v172 = vadd.f32 0.0, %v171
    %173 = vdwg.mxu0
    %v182 = vunpack.c.l.b16 %v92
    %v183 = vunpack.c.l.b16 %v93
    %v184 = vunpack.c.l.b16 %v94
    %v185 = vunpack.c.l.b16 %v95
    %v186 = vunpack.c.l.b16 %v96
    %v187 = vunpack.c.l.b16 %v97
    %v188 = vunpack.c.l.b16 %v98
    %v189 = vunpack.c.l.b16 %v99
    %v190 = vpack.c.b16 %v183, %v182
    %v191 = vpack.c.b16 %v185, %v184
    %v192 = vpack.c.b16 %v187, %v186
    %v193 = vpack.c.b16 %v189, %v188
    %v199 = vsel %vm132, %v84, 0
    %v202 = vsel %vm132, %v85, 0
    %v205 = vsel %vm132, %v86, 0
    %v208 = vsel %vm132, %v87, 0
    %210 = vmatpush.bf16.msra.mxu0 0
    %211 = vmatpush.bf16.msra.mxu0 0
    %212 = vmatpush.bf16.msra.mxu0 0
    %213 = vmatpush.bf16.msra.mxu0 0
    %214 = vmatpush.bf16.msra.mxu0 %v193
    %215 = vmatpush.bf16.msra.mxu0 %v192
    %216 = vmatpush.bf16.msra.mxu0 %v191
    %217 = vmatpush.bf16.msra.mxu0 %v190
    %218 = vmatmul.bf16.gmra.mxu0 %v199
    %v219 = vpop.f32.mrf.mxu0
    %v220 = vadd.f32 %v155, %v219
    %v221 = vpop.f32.mrf.mxu0
    %v222 = vadd.f32 %v157, %v221
    %223 = vmatmul.bf16.gmra.mxu0 %v202
    %v224 = vpop.f32.mrf.mxu0
    %v225 = vadd.f32 %v160, %v224
    %v226 = vpop.f32.mrf.mxu0
    %v227 = vadd.f32 %v162, %v226
    %228 = vmatmul.bf16.gmra.mxu0 %v205
    %v229 = vpop.f32.mrf.mxu0
    %v230 = vadd.f32 %v165, %v229
    %v231 = vpop.f32.mrf.mxu0
    %v232 = vadd.f32 %v167, %v231
    %233 = vmatmul.bf16.gmra.mxu0 %v208
    %v234 = vpop.f32.mrf.mxu0
    %v235 = vadd.f32 %v170, %v234
    %v236 = vpop.f32.mrf.mxu0
    %v237 = vadd.f32 %v172, %v236
    %238 = vdwg.mxu0
    %v239 = vperm.slane %v32, 0
    %v240 = vadd.f32 %v220, %v239
    %v241 = vadd.f32 %v222, %v239
    %v242 = vadd.f32 %v225, %v239
    %v243 = vadd.f32 %v227, %v239
    %v244 = vadd.f32 %v230, %v239
    %v245 = vadd.f32 %v232, %v239
    %v246 = vadd.f32 %v235, %v239
    %v247 = vadd.f32 %v237, %v239
    %v248 = vld [vmem:[#allocation2 + $0x40] sm:$0xf]
    %v249 = vld [vmem:[#allocation2 + $0x44] sm:$0xf]
    %v250 = vld [vmem:[#allocation2 + $0x48] sm:$0xf]
    %v251 = vld [vmem:[#allocation2 + $0x4c] sm:$0xf]
    %v252 = vld [vmem:[#allocation2 + $0x50] sm:$0xf]
    %v253 = vld [vmem:[#allocation2 + $0x54] sm:$0xf]
    %v254 = vld [vmem:[#allocation2 + $0x58] sm:$0xf]
    %v255 = vld [vmem:[#allocation2 + $0x5c] sm:$0xf]
    %vm256 = vcmp.ge.s32.totalorder %v35, 64
    %vm257 = vcmp.lt.s32.totalorder %v35, 96
    %vm258 = vmand %vm256, %vm257
    %vm259 = vcmp.lt.s32.totalorder %v35, 16
    %v264 = vunpack.c.l.b16 %v248
    %v265 = vunpack.c.l.b16 %v249
    %v266 = vunpack.c.l.b16 %v250
    %v267 = vunpack.c.l.b16 %v251
    %v268 = vpack.c.b16 %v265, %v264
    %v269 = vpack.c.b16 %v267, %v266
    %vm272 = vcmask 261120
    %v274 = vsel %vm272, 0, 0
    %276 = vmatpush.bf16.msra.mxu0 0
    %277 = vmatpush.bf16.msra.mxu0 0
    %278 = vmatpush.bf16.msra.mxu0 0
    %279 = vmatpush.bf16.msra.mxu0 0
    %280 = vmatpush.bf16.msra.mxu0 0
    %281 = vmatpush.bf16.msra.mxu0 0
    %282 = vmatpush.bf16.msra.mxu0 %v269
    %283 = vmatpush.bf16.msra.mxu0 %v268
    %284 = vmatmul.bf16.gmra.mxu0 %v274
    %v285 = vpop.f32.mrf.mxu0
    %v286 = vadd.f32 0.0, %v285
    %v287 = vpop.f32.mrf.mxu0
    %288 = vdwg.mxu0
    %v289 = vadd.f32 %v240, %v286
    %v290 = vtanh.pop %v289
    %v291 = vxor.u32 %v289, 2147483648
    %v292 = vmul.f32 %v291, 1.442695
    %v293 = vpow.pop %v292
    %v294 = vadd.f32 %v293, 1.0
    %v295 = vrcp.pop %v294
    %v296 = vmul.f32 %v294, %v295
    %v297 = vsub.f32 1.0, %v296
    %v298 = vmul.f32 %v295, %v297
    %v299 = vadd.f32 %v295, %v298
    %vm300 = vweird.f32 %v294
    %vm301 = vweird.f32 %v295
    %vm302 = vmor %vm300, %vm301
    %v303 = vsel %vm302, %v295, %v299
    %v304 = vand.u32 2147483647, %v294
    %vm305 = vcmp.eq.f32.partialorder %v304, 8.507059e+37
    %v306 = vand.u32 %v294, 2147483648
    %v307 = vor.u32 1.1754944e-38, %v306
    %v308 = vsel %vm305, %v307, %v303
    %v309 = vmul.f32 1.0, %v308
    %v310 = vsel %vm258, %v290, %v309
    %vm311 = vcmp.gt.s32.totalorder %v31, 0
    %v312 = vsel %vm311, 1, 0
    %v313 = vcvt.s32.f32 %v312
    %315 = vset.pattern.permute.xlu0 15
    %316 = vperm.xlu0 %315, %v313
    %v317 = vpop.permute.xlu0 %316
    %v319 = vsel %vm259, 1.0, %v317
    %v320 = vmul.f32 %v310, 0.0
    %322 = vrot.lane.b32.xlu0 %v310, 64
    %v323 = vpop.permute.xlu0 %322
    %v325 = vmul.f32 %v310, %v323
    %327 = vrot.lane.b32.xlu0 %v325, 32
    %v328 = vpop.permute.xlu0 %327
    %v330 = vadd.f32 %v320, %v328
    %332 = vrot.lane.b32.xlu0 %v330, 96
    %v333 = vpop.permute.xlu0 %332
    %v335 = vmul.f32 %v319, %v333
    %v336 = vtanh.pop %v335
    %338 = vrot.lane.b32.xlu0 %v336, 96
    %v339 = vpop.permute.xlu0 %338
    %v341 = vmul.f32 %v310, %v339
    %343 = vrot.lane.b32.xlu0 %v341, 32
    %v344 = vpop.permute.xlu0 %343
    %v346 = vmul.f32 %v319, %v344
    %v347 = vpack.c.bf16 %v346, %v346
    %v349 = vsel %vm272, %v347, 0
    %351 = vmatpush.bf16.msra.mxu0 0
    %352 = vmatpush.bf16.msra.mxu0 0
    %353 = vmatpush.bf16.msra.mxu0 0
    %354 = vmatpush.bf16.msra.mxu0 0
    %355 = vmatpush.bf16.msra.mxu0 0
    %356 = vmatpush.bf16.msra.mxu0 0
    %357 = vmatpush.bf16.msra.mxu0 %v269
    %358 = vmatpush.bf16.msra.mxu0 %v268
    %359 = vmatmul.bf16.gmra.mxu0 %v349
    %v360 = vpop.f32.mrf.mxu0
    %v361 = vadd.f32 0.0, %v360
    %v362 = vpop.f32.mrf.mxu0
    %363 = vdwg.mxu0
    %v364 = vadd.f32 %v241, %v361
    %v365 = vtanh.pop %v364
    %v366 = vxor.u32 %v364, 2147483648
    %v367 = vmul.f32 %v366, 1.442695
    %v368 = vpow.pop %v367
    %v369 = vadd.f32 %v368, 1.0
    %v370 = vrcp.pop %v369
    %v371 = vmul.f32 %v369, %v370
    %v372 = vsub.f32 1.0, %v371
    %v373 = vmul.f32 %v370, %v372
    %v374 = vadd.f32 %v370, %v373
    %vm375 = vweird.f32 %v369
    %vm376 = vweird.f32 %v370
    %vm377 = vmor %vm375, %vm376
    %v378 = vsel %vm377, %v370, %v374
    %v379 = vand.u32 2147483647, %v369
    %vm380 = vcmp.eq.f32.partialorder %v379, 8.507059e+37
    %v381 = vand.u32 %v369, 2147483648
    %v382 = vor.u32 1.1754944e-38, %v381
    %v383 = vsel %vm380, %v382, %v378
    %v384 = vmul.f32 1.0, %v383
    %v385 = vsel %vm258, %v365, %v384
    %386 = vset.pattern.permute.xlu0 14
    %387 = vperm.xlu0 %386, %v313
    %v388 = vpop.permute.xlu0 %387
    %v390 = vsel %vm259, 1.0, %v388
    %392 = vrot.lane.b32.xlu0 %v335, 32
    %v393 = vpop.permute.xlu0 %392
    %v395 = vmul.f32 %v385, %v393
    %397 = vrot.lane.b32.xlu0 %v385, 64
    %v398 = vpop.permute.xlu0 %397
    %v400 = vmul.f32 %v385, %v398
    %402 = vrot.lane.b32.xlu0 %v400, 32
    %v403 = vpop.permute.xlu0 %402
    %v405 = vadd.f32 %v395, %v403
    %407 = vrot.lane.b32.xlu0 %v405, 96
    %v408 = vpop.permute.xlu0 %407
    %v410 = vmul.f32 %v390, %v408
    %v411 = vtanh.pop %v410
    %413 = vrot.lane.b32.xlu0 %v411, 96
    %v414 = vpop.permute.xlu0 %413
    %v416 = vmul.f32 %v385, %v414
    %418 = vrot.lane.b32.xlu0 %v416, 32
    %v419 = vpop.permute.xlu0 %418
    %v421 = vmul.f32 %v390, %v419
    %v422 = vpack.c.bf16 %v421, %v421
    %v424 = vsel %vm272, %v422, 0
    %426 = vmatpush.bf16.msra.mxu0 0
    %427 = vmatpush.bf16.msra.mxu0 0
    %428 = vmatpush.bf16.msra.mxu0 0
    %429 = vmatpush.bf16.msra.mxu0 0
    %430 = vmatpush.bf16.msra.mxu0 0
    %431 = vmatpush.bf16.msra.mxu0 0
    %432 = vmatpush.bf16.msra.mxu0 %v269
    %433 = vmatpush.bf16.msra.mxu0 %v268
    %434 = vmatmul.bf16.gmra.mxu0 %v424
    %v435 = vpop.f32.mrf.mxu0
    %v436 = vadd.f32 0.0, %v435
    %v437 = vpop.f32.mrf.mxu0
    %438 = vdwg.mxu0
    %v439 = vadd.f32 %v242, %v436
    %v440 = vtanh.pop %v439
    %v441 = vxor.u32 %v439, 2147483648
    %v442 = vmul.f32 %v441, 1.442695
    %v443 = vpow.pop %v442
    %v444 = vadd.f32 %v443, 1.0
    %v445 = vrcp.pop %v444
    %v446 = vmul.f32 %v444, %v445
    %v447 = vsub.f32 1.0, %v446
    %v448 = vmul.f32 %v445, %v447
    %v449 = vadd.f32 %v445, %v448
    %vm450 = vweird.f32 %v444
    %vm451 = vweird.f32 %v445
    %vm452 = vmor %vm450, %vm451
    %v453 = vsel %vm452, %v445, %v449
    %v454 = vand.u32 2147483647, %v444
    %vm455 = vcmp.eq.f32.partialorder %v454, 8.507059e+37
    %v456 = vand.u32 %v444, 2147483648
    %v457 = vor.u32 1.1754944e-38, %v456
    %v458 = vsel %vm455, %v457, %v453
    %v459 = vmul.f32 1.0, %v458
    %v460 = vsel %vm258, %v440, %v459
    %461 = vset.pattern.permute.xlu0 13
    %462 = vperm.xlu0 %461, %v313
    %v463 = vpop.permute.xlu0 %462
    %v465 = vsel %vm259, 1.0, %v463
    %467 = vrot.lane.b32.xlu0 %v410, 32
    %v468 = vpop.permute.xlu0 %467
    %v470 = vmul.f32 %v460, %v468
    %472 = vrot.lane.b32.xlu0 %v460, 64
    %v473 = vpop.permute.xlu0 %472
    %v475 = vmul.f32 %v460, %v473
    %477 = vrot.lane.b32.xlu0 %v475, 32
    %v478 = vpop.permute.xlu0 %477
    %v480 = vadd.f32 %v470, %v478
    %482 = vrot.lane.b32.xlu0 %v480, 96
    %v483 = vpop.permute.xlu0 %482
    %v485 = vmul.f32 %v465, %v483
    %v486 = vtanh.pop %v485
    %488 = vrot.lane.b32.xlu0 %v486, 96
    %v489 = vpop.permute.xlu0 %488
    %v491 = vmul.f32 %v460, %v489
    %493 = vrot.lane.b32.xlu0 %v491, 32
    %v494 = vpop.permute.xlu0 %493
    %v496 = vmul.f32 %v465, %v494
    %v497 = vpack.c.bf16 %v496, %v496
    %v499 = vsel %vm272, %v497, 0
    %501 = vmatpush.bf16.msra.mxu0 0
    %502 = vmatpush.bf16.msra.mxu0 0
    %503 = vmatpush.bf16.msra.mxu0 0
    %504 = vmatpush.bf16.msra.mxu0 0
    %505 = vmatpush.bf16.msra.mxu0 0
    %506 = vmatpush.bf16.msra.mxu0 0
    %507 = vmatpush.bf16.msra.mxu0 %v269
    %508 = vmatpush.bf16.msra.mxu0 %v268
    %509 = vmatmul.bf16.gmra.mxu0 %v499
    %v510 = vpop.f32.mrf.mxu0
    %v511 = vadd.f32 0.0, %v510
    %v512 = vpop.f32.mrf.mxu0
    %513 = vdwg.mxu0
    %v514 = vadd.f32 %v243, %v511
    %v515 = vtanh.pop %v514
    %v516 = vxor.u32 %v514, 2147483648
    %v517 = vmul.f32 %v516, 1.442695
    %v518 = vpow.pop %v517
    %v519 = vadd.f32 %v518, 1.0
    %v520 = vrcp.pop %v519
    %v521 = vmul.f32 %v519, %v520
    %v522 = vsub.f32 1.0, %v521
    %v523 = vmul.f32 %v520, %v522
    %v524 = vadd.f32 %v520, %v523
    %vm525 = vweird.f32 %v519
    %vm526 = vweird.f32 %v520
    %vm527 = vmor %vm525, %vm526
    %v528 = vsel %vm527, %v520, %v524
    %v529 = vand.u32 2147483647, %v519
    %vm530 = vcmp.eq.f32.partialorder %v529, 8.507059e+37
    %v531 = vand.u32 %v519, 2147483648
    %v532 = vor.u32 1.1754944e-38, %v531
    %v533 = vsel %vm530, %v532, %v528
    %v534 = vmul.f32 1.0, %v533
    %v535 = vsel %vm258, %v515, %v534
    %536 = vset.pattern.permute.xlu0 12
    %537 = vperm.xlu0 %536, %v313
    %v538 = vpop.permute.xlu0 %537
    %v540 = vsel %vm259, 1.0, %v538
    %542 = vrot.lane.b32.xlu0 %v485, 32
    %v543 = vpop.permute.xlu0 %542
    %v545 = vmul.f32 %v535, %v543
    %547 = vrot.lane.b32.xlu0 %v535, 64
    %v548 = vpop.permute.xlu0 %547
    %v550 = vmul.f32 %v535, %v548
    %552 = vrot.lane.b32.xlu0 %v550, 32
    %v553 = vpop.permute.xlu0 %552
    %v555 = vadd.f32 %v545, %v553
    %557 = vrot.lane.b32.xlu0 %v555, 96
    %v558 = vpop.permute.xlu0 %557
    %v560 = vmul.f32 %v540, %v558
    %v561 = vtanh.pop %v560
    %563 = vrot.lane.b32.xlu0 %v561, 96
    %v564 = vpop.permute.xlu0 %563
    %v566 = vmul.f32 %v535, %v564
    %568 = vrot.lane.b32.xlu0 %v566, 32
    %v569 = vpop.permute.xlu0 %568
    %v571 = vmul.f32 %v540, %v569
    %v572 = vpack.c.bf16 %v571, %v571
    %v574 = vsel %vm272, %v572, 0
    %576 = vmatpush.bf16.msra.mxu0 0
    %577 = vmatpush.bf16.msra.mxu0 0
    %578 = vmatpush.bf16.msra.mxu0 0
    %579 = vmatpush.bf16.msra.mxu0 0
    %580 = vmatpush.bf16.msra.mxu0 0
    %581 = vmatpush.bf16.msra.mxu0 0
    %582 = vmatpush.bf16.msra.mxu0 %v269
    %583 = vmatpush.bf16.msra.mxu0 %v268
    %584 = vmatmul.bf16.gmra.mxu0 %v574
    %v585 = vpop.f32.mrf.mxu0
    %v586 = vadd.f32 0.0, %v585
    %v587 = vpop.f32.mrf.mxu0
    %588 = vdwg.mxu0
    %v589 = vadd.f32 %v244, %v586
    %v590 = vtanh.pop %v589
    %v591 = vxor.u32 %v589, 2147483648
    %v592 = vmul.f32 %v591, 1.442695
    %v593 = vpow.pop %v592
    %v594 = vadd.f32 %v593, 1.0
    %v595 = vrcp.pop %v594
    %v596 = vmul.f32 %v594, %v595
    %v597 = vsub.f32 1.0, %v596
    %v598 = vmul.f32 %v595, %v597
    %v599 = vadd.f32 %v595, %v598
    %vm600 = vweird.f32 %v594
    %vm601 = vweird.f32 %v595
    %vm602 = vmor %vm600, %vm601
    %v603 = vsel %vm602, %v595, %v599
    %v604 = vand.u32 2147483647, %v594
    %vm605 = vcmp.eq.f32.partialorder %v604, 8.507059e+37
    %v606 = vand.u32 %v594, 2147483648
    %v607 = vor.u32 1.1754944e-38, %v606
    %v608 = vsel %vm605, %v607, %v603
    %v609 = vmul.f32 1.0, %v608
    %v610 = vsel %vm258, %v590, %v609
    %611 = vset.pattern.permute.xlu0 11
    %612 = vperm.xlu0 %611, %v313
    %v613 = vpop.permute.xlu0 %612
    %v615 = vsel %vm259, 1.0, %v613
    %617 = vrot.lane.b32.xlu0 %v560, 32
    %v618 = vpop.permute.xlu0 %617
    %v620 = vmul.f32 %v610, %v618
    %622 = vrot.lane.b32.xlu0 %v610, 64
    %v623 = vpop.permute.xlu0 %622
    %v625 = vmul.f32 %v610, %v623
    %627 = vrot.lane.b32.xlu0 %v625, 32
    %v628 = vpop.permute.xlu0 %627
    %v630 = vadd.f32 %v620, %v628
    %632 = vrot.lane.b32.xlu0 %v630, 96
    %v633 = vpop.permute.xlu0 %632
    %v635 = vmul.f32 %v615, %v633
    %v636 = vtanh.pop %v635
    %638 = vrot.lane.b32.xlu0 %v636, 96
    %v639 = vpop.permute.xlu0 %638
    %v641 = vmul.f32 %v610, %v639
    %643 = vrot.lane.b32.xlu0 %v641, 32
    %v644 = vpop.permute.xlu0 %643
    %v646 = vmul.f32 %v615, %v644
    %v647 = vpack.c.bf16 %v646, %v646
    %v649 = vsel %vm272, %v647, 0
    %651 = vmatpush.bf16.msra.mxu0 0
    %652 = vmatpush.bf16.msra.mxu0 0
    %653 = vmatpush.bf16.msra.mxu0 0
    %654 = vmatpush.bf16.msra.mxu0 0
    %655 = vmatpush.bf16.msra.mxu0 0
    %656 = vmatpush.bf16.msra.mxu0 0
    %657 = vmatpush.bf16.msra.mxu0 %v269
    %658 = vmatpush.bf16.msra.mxu0 %v268
    %659 = vmatmul.bf16.gmra.mxu0 %v649
    %v660 = vpop.f32.mrf.mxu0
    %v661 = vadd.f32 0.0, %v660
    %v662 = vpop.f32.mrf.mxu0
    %663 = vdwg.mxu0
    %v664 = vadd.f32 %v245, %v661
    %v665 = vtanh.pop %v664
    %v666 = vxor.u32 %v664, 2147483648
    %v667 = vmul.f32 %v666, 1.442695
    %v668 = vpow.pop %v667
    %v669 = vadd.f32 %v668, 1.0
    %v670 = vrcp.pop %v669
    %v671 = vmul.f32 %v669, %v670
    %v672 = vsub.f32 1.0, %v671
    %v673 = vmul.f32 %v670, %v672
    %v674 = vadd.f32 %v670, %v673
    %vm675 = vweird.f32 %v669
    %vm676 = vweird.f32 %v670
    %vm677 = vmor %vm675, %vm676
    %v678 = vsel %vm677, %v670, %v674
    %v679 = vand.u32 2147483647, %v669
    %vm680 = vcmp.eq.f32.partialorder %v679, 8.507059e+37
    %v681 = vand.u32 %v669, 2147483648
    %v682 = vor.u32 1.1754944e-38, %v681
    %v683 = vsel %vm680, %v682, %v678
    %v684 = vmul.f32 1.0, %v683
    %v685 = vsel %vm258, %v665, %v684
    %686 = vset.pattern.permute.xlu0 10
    %687 = vperm.xlu0 %686, %v313
    %v688 = vpop.permute.xlu0 %687
    %v690 = vsel %vm259, 1.0, %v688
    %692 = vrot.lane.b32.xlu0 %v635, 32
    %v693 = vpop.permute.xlu0 %692
    %v695 = vmul.f32 %v685, %v693
    %697 = vrot.lane.b32.xlu0 %v685, 64
    %v698 = vpop.permute.xlu0 %697
    %v700 = vmul.f32 %v685, %v698
    %702 = vrot.lane.b32.xlu0 %v700, 32
    %v703 = vpop.permute.xlu0 %702
    %v705 = vadd.f32 %v695, %v703
    %707 = vrot.lane.b32.xlu0 %v705, 96
    %v708 = vpop.permute.xlu0 %707
    %v710 = vmul.f32 %v690, %v708
    %v711 = vtanh.pop %v710
    %713 = vrot.lane.b32.xlu0 %v711, 96
    %v714 = vpop.permute.xlu0 %713
    %v716 = vmul.f32 %v685, %v714
    %718 = vrot.lane.b32.xlu0 %v716, 32
    %v719 = vpop.permute.xlu0 %718
    %v721 = vmul.f32 %v690, %v719
    %v722 = vpack.c.bf16 %v721, %v721
    %v724 = vsel %vm272, %v722, 0
    %726 = vmatpush.bf16.msra.mxu0 0
    %727 = vmatpush.bf16.msra.mxu0 0
    %728 = vmatpush.bf16.msra.mxu0 0
    %729 = vmatpush.bf16.msra.mxu0 0
    %730 = vmatpush.bf16.msra.mxu0 0
    %731 = vmatpush.bf16.msra.mxu0 0
    %732 = vmatpush.bf16.msra.mxu0 %v269
    %733 = vmatpush.bf16.msra.mxu0 %v268
    %734 = vmatmul.bf16.gmra.mxu0 %v724
    %v735 = vpop.f32.mrf.mxu0
    %v736 = vadd.f32 0.0, %v735
    %v737 = vpop.f32.mrf.mxu0
    %738 = vdwg.mxu0
    %v739 = vadd.f32 %v246, %v736
    %v740 = vtanh.pop %v739
    %v741 = vxor.u32 %v739, 2147483648
    %v742 = vmul.f32 %v741, 1.442695
    %v743 = vpow.pop %v742
    %v744 = vadd.f32 %v743, 1.0
    %v745 = vrcp.pop %v744
    %v746 = vmul.f32 %v744, %v745
    %v747 = vsub.f32 1.0, %v746
    %v748 = vmul.f32 %v745, %v747
    %v749 = vadd.f32 %v745, %v748
    %vm750 = vweird.f32 %v744
    %vm751 = vweird.f32 %v745
    %vm752 = vmor %vm750, %vm751
    %v753 = vsel %vm752, %v745, %v749
    %v754 = vand.u32 2147483647, %v744
    %vm755 = vcmp.eq.f32.partialorder %v754, 8.507059e+37
    %v756 = vand.u32 %v744, 2147483648
    %v757 = vor.u32 1.1754944e-38, %v756
    %v758 = vsel %vm755, %v757, %v753
    %v759 = vmul.f32 1.0, %v758
    %v760 = vsel %vm258, %v740, %v759
    %761 = vset.pattern.permute.xlu0 9
    %762 = vperm.xlu0 %761, %v313
    %v763 = vpop.permute.xlu0 %762
    %v765 = vsel %vm259, 1.0, %v763
    %767 = vrot.lane.b32.xlu0 %v710, 32
    %v768 = vpop.permute.xlu0 %767
    %v770 = vmul.f32 %v760, %v768
    %772 = vrot.lane.b32.xlu0 %v760, 64
    %v773 = vpop.permute.xlu0 %772
    %v775 = vmul.f32 %v760, %v773
    %777 = vrot.lane.b32.xlu0 %v775, 32
    %v778 = vpop.permute.xlu0 %777
    %v780 = vadd.f32 %v770, %v778
    %782 = vrot.lane.b32.xlu0 %v780, 96
    %v783 = vpop.permute.xlu0 %782
    %v785 = vmul.f32 %v765, %v783
    %v786 = vtanh.pop %v785
    %788 = vrot.lane.b32.xlu0 %v786, 96
    %v789 = vpop.permute.xlu0 %788
    %v791 = vmul.f32 %v760, %v789
    %793 = vrot.lane.b32.xlu0 %v791, 32
    %v794 = vpop.permute.xlu0 %793
    %v796 = vmul.f32 %v765, %v794
    %v797 = vpack.c.bf16 %v796, %v796
    %v799 = vsel %vm272, %v797, 0
    %801 = vmatpush.bf16.msra.mxu0 0
    %802 = vmatpush.bf16.msra.mxu0 0
    %803 = vmatpush.bf16.msra.mxu0 0
    %804 = vmatpush.bf16.msra.mxu0 0
    %805 = vmatpush.bf16.msra.mxu0 0
    %806 = vmatpush.bf16.msra.mxu0 0
    %807 = vmatpush.bf16.msra.mxu0 %v269
    %808 = vmatpush.bf16.msra.mxu0 %v268
    %809 = vmatmul.bf16.gmra.mxu0 %v799
    %v810 = vpop.f32.mrf.mxu0
    %v811 = vadd.f32 0.0, %v810
    %v812 = vpop.f32.mrf.mxu0
    %813 = vdwg.mxu0
    %v814 = vadd.f32 %v247, %v811
    %v815 = vtanh.pop %v814
    %v816 = vxor.u32 %v814, 2147483648
    %v817 = vmul.f32 %v816, 1.442695
    %v818 = vpow.pop %v817
    %v819 = vadd.f32 %v818, 1.0
    %v820 = vrcp.pop %v819
    %v821 = vmul.f32 %v819, %v820
    %v822 = vsub.f32 1.0, %v821
    %v823 = vmul.f32 %v820, %v822
    %v824 = vadd.f32 %v820, %v823
    %vm825 = vweird.f32 %v819
    %vm826 = vweird.f32 %v820
    %vm827 = vmor %vm825, %vm826
    %v828 = vsel %vm827, %v820, %v824
    %v829 = vand.u32 2147483647, %v819
    %vm830 = vcmp.eq.f32.partialorder %v829, 8.507059e+37
    %v831 = vand.u32 %v819, 2147483648
    %v832 = vor.u32 1.1754944e-38, %v831
    %v833 = vsel %vm830, %v832, %v828
    %v834 = vmul.f32 1.0, %v833
    %v835 = vsel %vm258, %v815, %v834
    %836 = vset.pattern.permute.xlu0 8
    %837 = vperm.xlu0 %836, %v313
    %v838 = vpop.permute.xlu0 %837
    %v840 = vsel %vm259, 1.0, %v838
    %842 = vrot.lane.b32.xlu0 %v785, 32
    %v843 = vpop.permute.xlu0 %842
    %v845 = vmul.f32 %v835, %v843
    %847 = vrot.lane.b32.xlu0 %v835, 64
    %v848 = vpop.permute.xlu0 %847
    %v850 = vmul.f32 %v835, %v848
    %852 = vrot.lane.b32.xlu0 %v850, 32
    %v853 = vpop.permute.xlu0 %852
    %v855 = vadd.f32 %v845, %v853
    %857 = vrot.lane.b32.xlu0 %v855, 96
    %v858 = vpop.permute.xlu0 %857
    %v860 = vmul.f32 %v840, %v858
    %v861 = vtanh.pop %v860
    %863 = vrot.lane.b32.xlu0 %v861, 96
    %v864 = vpop.permute.xlu0 %863
    %v866 = vmul.f32 %v835, %v864
    %868 = vrot.lane.b32.xlu0 %v866, 32
    %v869 = vpop.permute.xlu0 %868
    %v871 = vmul.f32 %v840, %v869
    %v872 = vsel %vm259, %v346, %v871
    %v873 = vsel %vm259, %v421, %v796
    %v874 = vsel %vm259, %v496, %v721
    %v875 = vsel %vm259, %v571, %v646
    %v876 = vsel %vm259, %v646, %v571
    %v877 = vsel %vm259, %v721, %v496
    %v878 = vsel %vm259, %v796, %v421
    %v879 = vsel %vm259, %v871, %v346
    %v880 = vpack.c.bf16 %v873, %v872
    %v881 = vpack.c.bf16 %v875, %v874
    %v882 = vpack.c.bf16 %v877, %v876
    %v883 = vpack.c.bf16 %v879, %v878
    %v884 = vperm.slane %v32, 1
    %v889 = vunpack.c.l.b16 %v252
    %v890 = vunpack.c.l.b16 %v253
    %v891 = vunpack.c.l.b16 %v254
    %v892 = vunpack.c.l.b16 %v255
    %v893 = vpack.c.b16 %v890, %v889
    %v894 = vpack.c.b16 %v892, %v891
    %v898 = vsel %vm272, %v880, 0
    %v901 = vsel %vm272, %v881, 0
    %v904 = vsel %vm272, %v882, 0
    %v907 = vsel %vm272, %v883, 0
    %909 = vmatpush.bf16.msra.mxu0 0
    %910 = vmatpush.bf16.msra.mxu0 0
    %911 = vmatpush.bf16.msra.mxu0 0
    %912 = vmatpush.bf16.msra.mxu0 0
    %913 = vmatpush.bf16.msra.mxu0 0
    %914 = vmatpush.bf16.msra.mxu0 0
    %915 = vmatpush.bf16.msra.mxu0 %v894
    %916 = vmatpush.bf16.msra.mxu0 %v893
    %917 = vmatmul.bf16.gmra.mxu0 %v898
    %v918 = vpop.f32.mrf.mxu0
    %v919 = vadd.f32 %v884, %v918
    %v920 = vpop.f32.mrf.mxu0
    %v921 = vadd.f32 %v884, %v920
    %922 = vmatmul.bf16.gmra.mxu0 %v901
    %v923 = vpop.f32.mrf.mxu0
    %v924 = vadd.f32 %v884, %v923
    %v925 = vpop.f32.mrf.mxu0
    %v926 = vadd.f32 %v884, %v925
    %927 = vmatmul.bf16.gmra.mxu0 %v904
    %v928 = vpop.f32.mrf.mxu0
    %v929 = vadd.f32 %v884, %v928
    %v930 = vpop.f32.mrf.mxu0
    %v931 = vadd.f32 %v884, %v930
    %932 = vmatmul.bf16.gmra.mxu0 %v907
    %v933 = vpop.f32.mrf.mxu0
    %v934 = vadd.f32 %v884, %v933
    %v935 = vpop.f32.mrf.mxu0
    %v936 = vadd.f32 %v884, %v935
    %937 = vdwg.mxu0
    %v938 = vperm.slane %v32, 2
    %v939 = vadd.f32 %v938, %v919
    %941 = vset.pattern.permute.xlu0 0
    %942 = vperm.xlu0 %941, %v939
    %v943 = vpop.permute.xlu0 %942
    %v945 = vperm.slane %v33, 0
    %v946 = vadd.f32 %v943, %v945
    %947 = vset.pattern.permute.xlu0 1
    %948 = vperm.xlu0 %947, %v939
    %v949 = vpop.permute.xlu0 %948
    %v951 = vperm.slane %v33, 1
    %v952 = vadd.f32 %v949, %v951
    %vm953 = vcmp.gt.f32.partialorder %v952, %v946
    %v954 = vsel %vm953, %v952, %v946
    %v955 = vsel %vm953, 1, 0
    %956 = vset.pattern.permute.xlu0 2
    %957 = vperm.xlu0 %956, %v939
    %v958 = vpop.permute.xlu0 %957
    %v960 = vperm.slane %v33, 2
    %v961 = vadd.f32 %v958, %v960
    %vm962 = vcmp.gt.f32.partialorder %v961, %v954
    %v963 = vsel %vm962, %v961, %v954
    %v964 = vsel %vm962, 2, %v955
    %965 = vset.pattern.permute.xlu0 3
    %966 = vperm.xlu0 %965, %v939
    %v967 = vpop.permute.xlu0 %966
    %v969 = vperm.slane %v33, 3
    %v970 = vadd.f32 %v967, %v969
    %vm971 = vcmp.gt.f32.partialorder %v970, %v963
    %v972 = vsel %vm971, %v970, %v963
    %v973 = vsel %vm971, 3, %v964
    %974 = vset.pattern.permute.xlu0 4
    %975 = vperm.xlu0 %974, %v939
    %v976 = vpop.permute.xlu0 %975
    %v978 = vperm.slane %v33, 4
    %v979 = vadd.f32 %v976, %v978
    %vm980 = vcmp.gt.f32.partialorder %v979, %v972
    %v981 = vsel %vm980, %v979, %v972
    %v982 = vsel %vm980, 4, %v973
    %v983 = vadd.f32 %v981, %v921
    %984 = vset.pattern.permute.xlu0 9
    %985 = vperm.xlu0 %984, %v312
    %v986 = vpop.permute.xlu0 %985
    %vm987 = vcmp.eq.s32.totalorder %v986, 1
    %v988 = vsel %vm987, %v983, %v939
    %990 = vset.pattern.permute.xlu0 0
    %991 = vperm.xlu0 %990, %v988
    %v992 = vpop.permute.xlu0 %991
    %v994 = vadd.f32 %v992, %v945
    %995 = vset.pattern.permute.xlu0 1
    %996 = vperm.xlu0 %995, %v988
    %v997 = vpop.permute.xlu0 %996
    %v999 = vadd.f32 %v997, %v951
    %vm1000 = vcmp.gt.f32.partialorder %v999, %v994
    %v1001 = vsel %vm1000, %v999, %v994
    %v1002 = vsel %vm1000, 1, 0
    %1003 = vset.pattern.permute.xlu0 2
    %1004 = vperm.xlu0 %1003, %v988
    %v1005 = vpop.permute.xlu0 %1004
    %v1007 = vadd.f32 %v1005, %v960
    %vm1008 = vcmp.gt.f32.partialorder %v1007, %v1001
    %v1009 = vsel %vm1008, %v1007, %v1001
    %v1010 = vsel %vm1008, 2, %v1002
    %1011 = vset.pattern.permute.xlu0 3
    %1012 = vperm.xlu0 %1011, %v988
    %v1013 = vpop.permute.xlu0 %1012
    %v1015 = vadd.f32 %v1013, %v969
    %vm1016 = vcmp.gt.f32.partialorder %v1015, %v1009
    %v1017 = vsel %vm1016, %v1015, %v1009
    %v1018 = vsel %vm1016, 3, %v1010
    %1019 = vset.pattern.permute.xlu0 4
    %1020 = vperm.xlu0 %1019, %v988
    %v1021 = vpop.permute.xlu0 %1020
    %v1023 = vadd.f32 %v1021, %v978
    %vm1024 = vcmp.gt.f32.partialorder %v1023, %v1017
    %v1025 = vsel %vm1024, %v1023, %v1017
    %v1026 = vsel %vm1024, 4, %v1018
    %v1027 = vadd.f32 %v1025, %v924
    %1028 = vset.pattern.permute.xlu0 10
    %1029 = vperm.xlu0 %1028, %v312
    %v1030 = vpop.permute.xlu0 %1029
    %vm1031 = vcmp.eq.s32.totalorder %v1030, 1
    %v1032 = vsel %vm1031, %v1027, %v988
    %1034 = vset.pattern.permute.xlu0 0
    %1035 = vperm.xlu0 %1034, %v1032
    %v1036 = vpop.permute.xlu0 %1035
    %v1038 = vadd.f32 %v1036, %v945
    %1039 = vset.pattern.permute.xlu0 1
    %1040 = vperm.xlu0 %1039, %v1032
    %v1041 = vpop.permute.xlu0 %1040
    %v1043 = vadd.f32 %v1041, %v951
    %vm1044 = vcmp.gt.f32.partialorder %v1043, %v1038
    %v1045 = vsel %vm1044, %v1043, %v1038
    %v1046 = vsel %vm1044, 1, 0
    %1047 = vset.pattern.permute.xlu0 2
    %1048 = vperm.xlu0 %1047, %v1032
    %v1049 = vpop.permute.xlu0 %1048
    %v1051 = vadd.f32 %v1049, %v960
    %vm1052 = vcmp.gt.f32.partialorder %v1051, %v1045
    %v1053 = vsel %vm1052, %v1051, %v1045
    %v1054 = vsel %vm1052, 2, %v1046
    %1055 = vset.pattern.permute.xlu0 3
    %1056 = vperm.xlu0 %1055, %v1032
    %v1057 = vpop.permute.xlu0 %1056
    %v1059 = vadd.f32 %v1057, %v969
    %vm1060 = vcmp.gt.f32.partialorder %v1059, %v1053
    %v1061 = vsel %vm1060, %v1059, %v1053
    %v1062 = vsel %vm1060, 3, %v1054
    %1063 = vset.pattern.permute.xlu0 4
    %1064 = vperm.xlu0 %1063, %v1032
    %v1065 = vpop.permute.xlu0 %1064
    %v1067 = vadd.f32 %v1065, %v978
    %vm1068 = vcmp.gt.f32.partialorder %v1067, %v1061
    %v1069 = vsel %vm1068, %v1067, %v1061
    %v1070 = vsel %vm1068, 4, %v1062
    %v1071 = vadd.f32 %v1069, %v926
    %1072 = vset.pattern.permute.xlu0 11
    %1073 = vperm.xlu0 %1072, %v312
    %v1074 = vpop.permute.xlu0 %1073
    %vm1075 = vcmp.eq.s32.totalorder %v1074, 1
    %v1076 = vsel %vm1075, %v1071, %v1032
    %1078 = vset.pattern.permute.xlu0 0
    %1079 = vperm.xlu0 %1078, %v1076
    %v1080 = vpop.permute.xlu0 %1079
    %v1082 = vadd.f32 %v1080, %v945
    %1083 = vset.pattern.permute.xlu0 1
    %1084 = vperm.xlu0 %1083, %v1076
    %v1085 = vpop.permute.xlu0 %1084
    %v1087 = vadd.f32 %v1085, %v951
    %vm1088 = vcmp.gt.f32.partialorder %v1087, %v1082
    %v1089 = vsel %vm1088, %v1087, %v1082
    %v1090 = vsel %vm1088, 1, 0
    %1091 = vset.pattern.permute.xlu0 2
    %1092 = vperm.xlu0 %1091, %v1076
    %v1093 = vpop.permute.xlu0 %1092
    %v1095 = vadd.f32 %v1093, %v960
    %vm1096 = vcmp.gt.f32.partialorder %v1095, %v1089
    %v1097 = vsel %vm1096, %v1095, %v1089
    %v1098 = vsel %vm1096, 2, %v1090
    %1099 = vset.pattern.permute.xlu0 3
    %1100 = vperm.xlu0 %1099, %v1076
    %v1101 = vpop.permute.xlu0 %1100
    %v1103 = vadd.f32 %v1101, %v969
    %vm1104 = vcmp.gt.f32.partialorder %v1103, %v1097
    %v1105 = vsel %vm1104, %v1103, %v1097
    %v1106 = vsel %vm1104, 3, %v1098
    %1107 = vset.pattern.permute.xlu0 4
    %1108 = vperm.xlu0 %1107, %v1076
    %v1109 = vpop.permute.xlu0 %1108
    %v1111 = vadd.f32 %v1109, %v978
    %vm1112 = vcmp.gt.f32.partialorder %v1111, %v1105
    %v1113 = vsel %vm1112, %v1111, %v1105
    %v1114 = vsel %vm1112, 4, %v1106
    %v1115 = vadd.f32 %v1113, %v929
    %1116 = vset.pattern.permute.xlu0 12
    %1117 = vperm.xlu0 %1116, %v312
    %v1118 = vpop.permute.xlu0 %1117
    %vm1119 = vcmp.eq.s32.totalorder %v1118, 1
    %v1120 = vsel %vm1119, %v1115, %v1076
    %1122 = vset.pattern.permute.xlu0 0
    %1123 = vperm.xlu0 %1122, %v1120
    %v1124 = vpop.permute.xlu0 %1123
    %v1126 = vadd.f32 %v1124, %v945
    %1127 = vset.pattern.permute.xlu0 1
    %1128 = vperm.xlu0 %1127, %v1120
    %v1129 = vpop.permute.xlu0 %1128
    %v1131 = vadd.f32 %v1129, %v951
    %vm1132 = vcmp.gt.f32.partialorder %v1131, %v1126
    %v1133 = vsel %vm1132, %v1131, %v1126
    %v1134 = vsel %vm1132, 1, 0
    %1135 = vset.pattern.permute.xlu0 2
    %1136 = vperm.xlu0 %1135, %v1120
    %v1137 = vpop.permute.xlu0 %1136
    %v1139 = vadd.f32 %v1137, %v960
    %vm1140 = vcmp.gt.f32.partialorder %v1139, %v1133
    %v1141 = vsel %vm1140, %v1139, %v1133
    %v1142 = vsel %vm1140, 2, %v1134
    %1143 = vset.pattern.permute.xlu0 3
    %1144 = vperm.xlu0 %1143, %v1120
    %v1145 = vpop.permute.xlu0 %1144
    %v1147 = vadd.f32 %v1145, %v969
    %vm1148 = vcmp.gt.f32.partialorder %v1147, %v1141
    %v1149 = vsel %vm1148, %v1147, %v1141
    %v1150 = vsel %vm1148, 3, %v1142
    %1151 = vset.pattern.permute.xlu0 4
    %1152 = vperm.xlu0 %1151, %v1120
    %v1153 = vpop.permute.xlu0 %1152
    %v1155 = vadd.f32 %v1153, %v978
    %vm1156 = vcmp.gt.f32.partialorder %v1155, %v1149
    %v1157 = vsel %vm1156, %v1155, %v1149
    %v1158 = vsel %vm1156, 4, %v1150
    %v1159 = vadd.f32 %v1157, %v931
    %1160 = vset.pattern.permute.xlu0 13
    %1161 = vperm.xlu0 %1160, %v312
    %v1162 = vpop.permute.xlu0 %1161
    %vm1163 = vcmp.eq.s32.totalorder %v1162, 1
    %v1164 = vsel %vm1163, %v1159, %v1120
    %1166 = vset.pattern.permute.xlu0 0
    %1167 = vperm.xlu0 %1166, %v1164
    %v1168 = vpop.permute.xlu0 %1167
    %v1170 = vadd.f32 %v1168, %v945
    %1171 = vset.pattern.permute.xlu0 1
    %1172 = vperm.xlu0 %1171, %v1164
    %v1173 = vpop.permute.xlu0 %1172
    %v1175 = vadd.f32 %v1173, %v951
    %vm1176 = vcmp.gt.f32.partialorder %v1175, %v1170
    %v1177 = vsel %vm1176, %v1175, %v1170
    %v1178 = vsel %vm1176, 1, 0
    %1179 = vset.pattern.permute.xlu0 2
    %1180 = vperm.xlu0 %1179, %v1164
    %v1181 = vpop.permute.xlu0 %1180
    %v1183 = vadd.f32 %v1181, %v960
    %vm1184 = vcmp.gt.f32.partialorder %v1183, %v1177
    %v1185 = vsel %vm1184, %v1183, %v1177
    %v1186 = vsel %vm1184, 2, %v1178
    %1187 = vset.pattern.permute.xlu0 3
    %1188 = vperm.xlu0 %1187, %v1164
    %v1189 = vpop.permute.xlu0 %1188
    %v1191 = vadd.f32 %v1189, %v969
    %vm1192 = vcmp.gt.f32.partialorder %v1191, %v1185
    %v1193 = vsel %vm1192, %v1191, %v1185
    %v1194 = vsel %vm1192, 3, %v1186
    %1195 = vset.pattern.permute.xlu0 4
    %1196 = vperm.xlu0 %1195, %v1164
    %v1197 = vpop.permute.xlu0 %1196
    %v1199 = vadd.f32 %v1197, %v978
    %vm1200 = vcmp.gt.f32.partialorder %v1199, %v1193
    %v1201 = vsel %vm1200, %v1199, %v1193
    %v1202 = vsel %vm1200, 4, %v1194
    %v1203 = vadd.f32 %v1201, %v934
    %1204 = vset.pattern.permute.xlu0 14
    %1205 = vperm.xlu0 %1204, %v312
    %v1206 = vpop.permute.xlu0 %1205
    %vm1207 = vcmp.eq.s32.totalorder %v1206, 1
    %v1208 = vsel %vm1207, %v1203, %v1164
    %1210 = vset.pattern.permute.xlu0 0
    %1211 = vperm.xlu0 %1210, %v1208
    %v1212 = vpop.permute.xlu0 %1211
    %v1214 = vadd.f32 %v1212, %v945
    %1215 = vset.pattern.permute.xlu0 1
    %1216 = vperm.xlu0 %1215, %v1208
    %v1217 = vpop.permute.xlu0 %1216
    %v1219 = vadd.f32 %v1217, %v951
    %vm1220 = vcmp.gt.f32.partialorder %v1219, %v1214
    %v1221 = vsel %vm1220, %v1219, %v1214
    %v1222 = vsel %vm1220, 1, 0
    %1223 = vset.pattern.permute.xlu0 2
    %1224 = vperm.xlu0 %1223, %v1208
    %v1225 = vpop.permute.xlu0 %1224
    %v1227 = vadd.f32 %v1225, %v960
    %vm1228 = vcmp.gt.f32.partialorder %v1227, %v1221
    %v1229 = vsel %vm1228, %v1227, %v1221
    %v1230 = vsel %vm1228, 2, %v1222
    %1231 = vset.pattern.permute.xlu0 3
    %1232 = vperm.xlu0 %1231, %v1208
    %v1233 = vpop.permute.xlu0 %1232
    %v1235 = vadd.f32 %v1233, %v969
    %vm1236 = vcmp.gt.f32.partialorder %v1235, %v1229
    %v1237 = vsel %vm1236, %v1235, %v1229
    %v1238 = vsel %vm1236, 3, %v1230
    %1239 = vset.pattern.permute.xlu0 4
    %1240 = vperm.xlu0 %1239, %v1208
    %v1241 = vpop.permute.xlu0 %1240
    %v1243 = vadd.f32 %v1241, %v978
    %vm1244 = vcmp.gt.f32.partialorder %v1243, %v1237
    %v1245 = vsel %vm1244, %v1243, %v1237
    %v1246 = vsel %vm1244, 4, %v1238
    %v1247 = vadd.f32 %v1245, %v936
    %1248 = vset.pattern.permute.xlu0 15
    %1249 = vperm.xlu0 %1248, %v312
    %v1250 = vpop.permute.xlu0 %1249
    %vm1251 = vcmp.eq.s32.totalorder %v1250, 1
    %v1252 = vsel %vm1251, %v1247, %v1208
    %v1253 = vperm.slane %v32, 3
    %v1254 = vadd.f32 %v1252, %v1253
    %vm1255 = vcmask 39936
    %v1256 = vsel %vm1255, %v1254, -inf
    %1257 = vmax.xlane.f32.xlu0 %v1256
    %v1258 = vpop.xlane.xlu0 %1257
    %vm1259 = vcmp.eq.f32.partialorder %v1254, %v1258
    %v1260 = vsel %vm1259, %v35, 5
    %v1261 = vsel %vm1255, %v1260, 2147483647
    %v1262 = vand.u32 %v1261, 65535
    %v1263 = vshra.s32 %v1261, 16
    %v1264 = vcvt.s32.f32 %v1262
    %v1265 = vcvt.s32.f32 %v1263
    %1266 = vmin.xlane.f32.xlu0 %v1265
    %v1267 = vpop.xlane.xlu0 %1266
    %vm1268 = vcmp.eq.f32.partialorder %v1265, %v1267
    %v1269 = vsel %vm1268, %v1264, inf
    %1270 = vmin.xlane.f32.xlu0 %v1269
    %v1271 = vpop.xlane.xlu0 %1270
    %v1272 = vcvt.f32.s32 %v1271
    %v1273 = vcvt.f32.s32 %v1267
    %v1274 = vshll.u32 %v1273, 16
    %v1275 = vadd.s32 %v1274, %v1272
    %vm1276 = vcmp.eq.s32.totalorder %v35, %v1275
    %v1277 = vsel %vm1276, 1, 0
    %v1278 = vmul.u32 %v1246, %v1277
    %v1279 = vsel %vm1255, %v1278, 0
    %v1280 = vand.u32 %v1279, 65535
    %v1281 = vshrl.u32 %v1279, 16
    %v1282 = vcvt.s32.f32 %v1280
    %v1283 = vcvt.s32.f32 %v1281
    %1284 = vadd.xlane.f32.xlu0 %v1282
    %v1285 = vpop.xlane.xlu0 %1284
    %1286 = vadd.xlane.f32.xlu0 %v1283
    %v1287 = vpop.xlane.xlu0 %1286
    %v1288 = vcvt.f32.s32 %v1285
    %v1289 = vcvt.f32.s32 %v1287
    %v1290 = vshll.u32 %v1289, 16
    %v1291 = vadd.s32 %v1290, %v1288
    %v1292 = vsel %vm311, %v1291, %v1275
    %1293 = vset.pattern.permute.xlu0 15
    %1294 = vperm.xlu0 %1293, %v1292
    %v1295 = vpop.permute.xlu0 %1294
    %vm1296 = vcmp.eq.s32.totalorder %v35, %v1295
    %v1297 = vsel %vm1296, 1, 0
    %v1298 = vmul.u32 %v1202, %v1297
    %v1299 = vsel %vm1255, %v1298, 0
    %v1300 = vand.u32 %v1299, 65535
    %v1301 = vshrl.u32 %v1299, 16
    %v1302 = vcvt.s32.f32 %v1300
    %v1303 = vcvt.s32.f32 %v1301
    %1304 = vadd.xlane.f32.xlu0 %v1302
    %v1305 = vpop.xlane.xlu0 %1304
    %1306 = vadd.xlane.f32.xlu0 %v1303
    %v1307 = vpop.xlane.xlu0 %1306
    %v1308 = vcvt.f32.s32 %v1305
    %v1309 = vcvt.f32.s32 %v1307
    %v1310 = vshll.u32 %v1309, 16
    %v1311 = vadd.s32 %v1310, %v1308
    %1312 = vrot.lane.b32.xlu0 %v1292, 127
    %v1313 = vpop.permute.xlu0 %1312
    %v1314 = vsel %vm311, %v1311, %v1313
    %1315 = vset.pattern.permute.xlu0 14
    %1316 = vperm.xlu0 %1315, %v1314
    %v1317 = vpop.permute.xlu0 %1316
    %vm1318 = vcmp.eq.s32.totalorder %v35, %v1317
    %v1319 = vsel %vm1318, 1, 0
    %v1320 = vmul.u32 %v1158, %v1319
    %v1321 = vsel %vm1255, %v1320, 0
    %v1322 = vand.u32 %v1321, 65535
    %v1323 = vshrl.u32 %v1321, 16
    %v1324 = vcvt.s32.f32 %v1322
    %v1325 = vcvt.s32.f32 %v1323
    %1326 = vadd.xlane.f32.xlu0 %v1324
    %v1327 = vpop.xlane.xlu0 %1326
    %1328 = vadd.xlane.f32.xlu0 %v1325
    %v1329 = vpop.xlane.xlu0 %1328
    %v1330 = vcvt.f32.s32 %v1327
    %v1331 = vcvt.f32.s32 %v1329
    %v1332 = vshll.u32 %v1331, 16
    %v1333 = vadd.s32 %v1332, %v1330
    %1334 = vrot.lane.b32.xlu0 %v1314, 127
    %v1335 = vpop.permute.xlu0 %1334
    %v1336 = vsel %vm311, %v1333, %v1335
    %1337 = vset.pattern.permute.xlu0 13
    %1338 = vperm.xlu0 %1337, %v1336
    %v1339 = vpop.permute.xlu0 %1338
    %vm1340 = vcmp.eq.s32.totalorder %v35, %v1339
    %v1341 = vsel %vm1340, 1, 0
    %v1342 = vmul.u32 %v1114, %v1341
    %v1343 = vsel %vm1255, %v1342, 0
    %v1344 = vand.u32 %v1343, 65535
    %v1345 = vshrl.u32 %v1343, 16
    %v1346 = vcvt.s32.f32 %v1344
    %v1347 = vcvt.s32.f32 %v1345
    %1348 = vadd.xlane.f32.xlu0 %v1346
    %v1349 = vpop.xlane.xlu0 %1348
    %1350 = vadd.xlane.f32.xlu0 %v1347
    %v1351 = vpop.xlane.xlu0 %1350
    %v1352 = vcvt.f32.s32 %v1349
    %v1353 = vcvt.f32.s32 %v1351
    %v1354 = vshll.u32 %v1353, 16
    %v1355 = vadd.s32 %v1354, %v1352
    %1356 = vrot.lane.b32.xlu0 %v1336, 127
    %v1357 = vpop.permute.xlu0 %1356
    %v1358 = vsel %vm311, %v1355, %v1357
    %1359 = vset.pattern.permute.xlu0 12
    %1360 = vperm.xlu0 %1359, %v1358
    %v1361 = vpop.permute.xlu0 %1360
    %vm1362 = vcmp.eq.s32.totalorder %v35, %v1361
    %v1363 = vsel %vm1362, 1, 0
    %v1364 = vmul.u32 %v1070, %v1363
    %v1365 = vsel %vm1255, %v1364, 0
    %v1366 = vand.u32 %v1365, 65535
    %v1367 = vshrl.u32 %v1365, 16
    %v1368 = vcvt.s32.f32 %v1366
    %v1369 = vcvt.s32.f32 %v1367
    %1370 = vadd.xlane.f32.xlu0 %v1368
    %v1371 = vpop.xlane.xlu0 %1370
    %1372 = vadd.xlane.f32.xlu0 %v1369
    %v1373 = vpop.xlane.xlu0 %1372
    %v1374 = vcvt.f32.s32 %v1371
    %v1375 = vcvt.f32.s32 %v1373
    %v1376 = vshll.u32 %v1375, 16
    %v1377 = vadd.s32 %v1376, %v1374
    %1378 = vrot.lane.b32.xlu0 %v1358, 127
    %v1379 = vpop.permute.xlu0 %1378
    %v1380 = vsel %vm311, %v1377, %v1379
    %1381 = vset.pattern.permute.xlu0 11
    %1382 = vperm.xlu0 %1381, %v1380
    %v1383 = vpop.permute.xlu0 %1382
    %vm1384 = vcmp.eq.s32.totalorder %v35, %v1383
    %v1385 = vsel %vm1384, 1, 0
    %v1386 = vmul.u32 %v1026, %v1385
    %v1387 = vsel %vm1255, %v1386, 0
    %v1388 = vand.u32 %v1387, 65535
    %v1389 = vshrl.u32 %v1387, 16
    %v1390 = vcvt.s32.f32 %v1388
    %v1391 = vcvt.s32.f32 %v1389
    %1392 = vadd.xlane.f32.xlu0 %v1390
    %v1393 = vpop.xlane.xlu0 %1392
    %1394 = vadd.xlane.f32.xlu0 %v1391
    %v1395 = vpop.xlane.xlu0 %1394
    %v1396 = vcvt.f32.s32 %v1393
    %v1397 = vcvt.f32.s32 %v1395
    %v1398 = vshll.u32 %v1397, 16
    %v1399 = vadd.s32 %v1398, %v1396
    %1400 = vrot.lane.b32.xlu0 %v1380, 127
    %v1401 = vpop.permute.xlu0 %1400
    %v1402 = vsel %vm311, %v1399, %v1401
    %1403 = vset.pattern.permute.xlu0 10
    %1404 = vperm.xlu0 %1403, %v1402
    %v1405 = vpop.permute.xlu0 %1404
    %vm1406 = vcmp.eq.s32.totalorder %v35, %v1405
    %v1407 = vsel %vm1406, 1, 0
    %v1408 = vmul.u32 %v982, %v1407
    %v1409 = vsel %vm1255, %v1408, 0
    %v1410 = vand.u32 %v1409, 65535
    %v1411 = vshrl.u32 %v1409, 16
    %v1412 = vcvt.s32.f32 %v1410
    %v1413 = vcvt.s32.f32 %v1411
    %1414 = vadd.xlane.f32.xlu0 %v1412
    %v1415 = vpop.xlane.xlu0 %1414
    %1416 = vadd.xlane.f32.xlu0 %v1413
    %v1417 = vpop.xlane.xlu0 %1416
    %v1418 = vcvt.f32.s32 %v1415
    %v1419 = vcvt.f32.s32 %v1417
    %v1420 = vshll.u32 %v1419, 16
    %v1421 = vadd.s32 %v1420, %v1418
    %1422 = vrot.lane.b32.xlu0 %v1402, 127
    %v1423 = vpop.permute.xlu0 %1422
    %v1424 = vsel %vm311, %v1421, %v1423
    %1425 = vrot.lane.b32.xlu0 %v1424, 127
    %v1426 = vpop.permute.xlu0 %1425
    %v1427 = vsel %vm311, %v1426, 0
    %v1428 = vsel %vm311, %v1423, 0
    %v1429 = vsel %vm311, %v1401, 0
    %v1430 = vsel %vm311, %v1379, 0
    %v1431 = vsel %vm311, %v1357, 0
    %v1432 = vsel %vm311, %v1335, 0
    %v1433 = vsel %vm311, %v1313, 0
    %v1434 = vsel %vm311, %v1275, 0
    %1435 = vrot.lane.b32.xlu0 %v1427, 120
    %v1436 = vpop.permute.xlu0 %1435
    %1437 = vrot.lane.b32.xlu0 %v1428, 120
    %v1438 = vpop.permute.xlu0 %1437
    %1439 = vrot.lane.b32.xlu0 %v1429, 120
    %v1440 = vpop.permute.xlu0 %1439
    %1441 = vrot.lane.b32.xlu0 %v1430, 120
    %v1442 = vpop.permute.xlu0 %1441
    %1443 = vrot.lane.b32.xlu0 %v1431, 120
    %v1444 = vpop.permute.xlu0 %1443
    %1445 = vrot.lane.b32.xlu0 %v1432, 120
    %v1446 = vpop.permute.xlu0 %1445
    %1447 = vrot.lane.b32.xlu0 %v1433, 120
    %v1448 = vpop.permute.xlu0 %1447
    %1449 = vrot.lane.b32.xlu0 %v1434, 120
    %v1450 = vpop.permute.xlu0 %1449
    %vm1451 = vcmask 7168
    %v1452 = vsel %vm1451, %v1436, %v1438
    %vm1453 = vcmask 15360
    %v1454 = vsel %vm1453, %v1452, %v1440
    %vm1455 = vcmask 23552
    %v1456 = vsel %vm1455, %v1454, %v1442
    %vm1457 = vcmask 31744
    %v1458 = vsel %vm1457, %v1456, %v1444
    %v1459 = vsel %vm1255, %v1458, %v1446
    %vm1460 = vcmask 48128
    %v1461 = vsel %vm1460, %v1459, %v1448
    %vm1462 = vcmask 56320
    %v1463 = vsel %vm1462, %v1461, %v1450
    %vm1464 = vcmask 64512
    %1465 = vst.msk [vmem:[%s3] sm:$0xff] %vm1464, %v1463
    // Predicated region
    $region18: #{bilstm_crf_forward.1} parent=1 // pred_check
      _
    $region19: #{bilstm_crf_forward.1} parent=1 // pred_check_branch
      %1467 = sbr.rel (0) target = $region21
    $region20: #{bilstm_crf_forward.1} parent=1 // pred_region
      _
    $region21: #{bilstm_crf_forward.1} parent=1 // pred_fallthru
      _
    // Predicated region
    $region22: #{bilstm_crf_forward.1} parent=1 // pred_check
      _
    $region23: #{bilstm_crf_forward.1} parent=1 // pred_check_branch
      %1469 = sbr.rel (0) target = $region25
    $region24: #{bilstm_crf_forward.1} parent=1 // pred_region
      _
    $region25: #{bilstm_crf_forward.1} parent=1 // pred_fallthru
      _
    %1470 = vsyncpa [#allocation3], 1

</llo_original>
